<compile_context>
chip_gen: v7x
topology: tpu7x:2x2x1
jax: 0.10.0
libtpu: 0.0.40
codegen_flags: <defaults>
</compile_context>

<pallas_src>
import functools
import math

import numpy as np
import jax
import jax.numpy as jnp
from jax.experimental import pallas as pl
from jax.experimental.pallas import tpu as pltpu

NUM_ROTATIONS = 16
BN_EPS = 1e-5
UPSAMPLE_SCALE = 16
CONV0_OUT = 64
TK = 512                      # channel-chunk size (review: keep tk <= 512)


# ---------------------------------------------------------------------------
# Host-side construction of the rotate-back + separable bilinear operators.
# ---------------------------------------------------------------------------
def _bilinear_matrix(in_size, out_size):
    """PyTorch nn.Upsample(mode='bilinear', align_corners=False) row weights."""
    scale = in_size / out_size
    A = np.zeros((out_size, in_size), dtype=np.float64)
    for o in range(out_size):
        real = scale * (o + 0.5) - 0.5
        real = max(real, 0.0)
        i0 = min(int(math.floor(real)), in_size - 1)
        i1 = i0 + 1 if i0 < in_size - 1 else i0
        l1 = real - i0
        A[o, i0] += 1.0 - l1
        A[o, i1] += l1
    return A


def _build_rotation_gather(H, W, theta_mat):
    """R[src, dst] = 1 iff the nearest rotate-back gather maps dst <- src.

    Matches grid_sample(mode='nearest', align_corners=True, zeros padding) on
    an affine_grid built with align_corners=False normalization (the original
    module's mixed convention).  np.rint = round-half-to-even (nearbyint)."""
    th = np.asarray(theta_mat, dtype=np.float32)
    xs = (2.0 * np.arange(W, dtype=np.float32) + 1.0) / W - 1.0
    ys = (2.0 * np.arange(H, dtype=np.float32) + 1.0) / H - 1.0
    gx = th[0, 0] * xs[None, :] + th[0, 1] * ys[:, None] + th[0, 2]
    gy = th[1, 0] * xs[None, :] + th[1, 1] * ys[:, None] + th[1, 2]
    ix = (gx + 1.0) * 0.5 * (W - 1)           # unnormalize, align_corners=True
    iy = (gy + 1.0) * 0.5 * (H - 1)
    ixn = np.rint(ix).astype(np.int64)
    iyn = np.rint(iy).astype(np.int64)
    valid = (ixn >= 0) & (ixn < W) & (iyn >= 0) & (iyn < H)
    ixc = np.clip(ixn, 0, W - 1)
    iyc = np.clip(iyn, 0, H - 1)
    R = np.zeros((H * W, H * W), dtype=np.float64)
    dst = np.arange(H * W)
    src = (iyc * W + ixc).reshape(-1)
    R[src, dst] = valid.reshape(-1).astype(np.float64)
    return R


def _build_separable_operators(B, H, W, scale, theta_mat):
    """Build RBT [P,P], AWE [P,Wo], AHW [B*Ho,P] with P = B*H*W such that

        out[b*Ho+oh, ow] = sum_p AHW[b*Ho+oh, p] * (RBT@q)[p] * AWE[p, ow]

    equals: bilinear x`scale` upsample (align_corners=False) of the
    nearest rotate-back (zero padded) of the per-image q maps."""
    Ho, Wo = H * scale, W * scale
    HW = H * W
    P = B * HW

    R = _build_rotation_gather(H, W, theta_mat)          # [HW, HW]
    RBT = np.kron(np.eye(B), R.T)                        # [P, P]   (0/1)

    Ah = _bilinear_matrix(H, Ho)                         # [Ho, H]
    Aw = _bilinear_matrix(W, Wo)                         # [Wo, W]

    pidx = np.arange(P)
    b_p = pidx // HW
    h_p = (pidx % HW) // W
    w_p = pidx % W

    AWE = Aw[:, w_p].T                                   # [P, Wo]
    oh = np.tile(np.arange(Ho), B)                       # [B*Ho]
    rb = np.repeat(np.arange(B), Ho)                     # [B*Ho]
    AHW = Ah[oh[:, None], h_p[None, :]] * (rb[:, None] == b_p[None, :])

    # RBT / AHW go to the MXU -> bf16 (0/1 exact; bilinear weights <=2^-8 rel).
    return (jnp.asarray(RBT, jnp.bfloat16),
            jnp.asarray(AWE, jnp.float32),
            jnp.asarray(AHW, jnp.bfloat16))


# ---------------------------------------------------------------------------
# Pallas kernel: grid=(C // tk,) over channel chunks, both heads per step.
# ---------------------------------------------------------------------------
def _fused_heads_kernel(xp_ref, xg_ref, w0p_ref, w0g_ref, w1p_ref, w1g_ref,
                        rbt_ref, awe_ref, ahw_ref,
                        op_ref, og_ref, accp_ref, accg_ref):
    # xp/xg   : [P, tk]        f32  (push / grasp feature chunk, NHWC-flattened)
    # w0p/w0g : [tk, 64]       bf16 (1x1 conv #0 weight chunk, [Cin, Cout])
    # w1p/w1g : [1, 64]        f32  (1x1 conv #1 weights as a row vector)
    # rbt     : [P, P]         bf16 (block-diag nearest rotate-back gather)
    # awe     : [P, Wo]        f32  (per-source-pixel column bilinear weights)
    # ahw     : [B*Ho, P]      bf16 (row bilinear weights + batch unflatten)
    # op/og   : [B*Ho, Wo]     f32
    # accp/accg: [P, 64]       f32  VMEM accumulators (conv0 outputs)
    k = pl.program_id(0)
    inv_p = 1.0 / float(xp_ref.shape[0])

    @pl.when(k == 0)
    def _init():
        accp_ref[...] = jnp.zeros_like(accp_ref)
        accg_ref[...] = jnp.zeros_like(accg_ref)

    def bn_relu_conv0_chunk(x_ref, w0_ref, acc_ref):
        x = x_ref[...]                                           # [P, tk] f32
        # BatchNorm2d(2048), train mode, gamma=1 / beta=0 (module __init__),
        # one-pass biased variance (review: avoid materializing x - mean twice).
        mean = jnp.sum(x, axis=0, keepdims=True) * inv_p
        meansq = jnp.sum(x * x, axis=0, keepdims=True) * inv_p
        var = jnp.maximum(meansq - mean * mean, 0.0)
        xr = jnp.maximum((x - mean) * jax.lax.rsqrt(var + BN_EPS), 0.0)
        # Conv2d(2048, 64, k=1, bias=False): per-chunk bf16 pack + MXU matmul,
        # f32 accumulation into the resident VMEM accumulator.
        acc_ref[...] += jnp.dot(xr.astype(jnp.bfloat16), w0_ref[...],
                                preferred_element_type=jnp.float32)

    bn_relu_conv0_chunk(xp_ref, w0p_ref, accp_ref)
    bn_relu_conv0_chunk(xg_ref, w0g_ref, accg_ref)

    @pl.when(k == pl.num_programs(0) - 1)
    def _tail():
        def head_tail(acc_ref, w1_ref, o_ref):
            h = acc_ref[...]                                     # [P, 64] f32
            # BatchNorm2d(64), train mode + ReLU.
            mean = jnp.sum(h, axis=0, keepdims=True) * inv_p
            meansq = jnp.sum(h * h, axis=0, keepdims=True) * inv_p
            var = jnp.maximum(meansq - mean * mean, 0.0)
            hn = jnp.maximum((h - mean) * jax.lax.rsqrt(var + BN_EPS), 0.0)
            # Rotate-back (nearest, zero pad).  Applied before conv1 -- they
            # commute since conv1 is 1x1, linear and bias-free (0 -> 0).
            hr = jnp.dot(rbt_ref[...], hn.astype(jnp.bfloat16),
                         preferred_element_type=jnp.float32)     # [P, 64]
            # Conv2d(64, 1, k=1, bias=False) as one VPU weighted channel sum.
            q = jnp.sum(hr * w1_ref[...], axis=-1, keepdims=True)  # [P, 1]
            # Separable bilinear x16 upsample:
            #   column weights (VPU broadcast) then row weights + batch
            #   unflatten as one bf16 MXU matmul -> [B*Ho, Wo].
            v = (q * awe_ref[...]).astype(jnp.bfloat16)            # [P, Wo]
            o_ref[...] = jnp.dot(ahw_ref[...], v,
                                 preferred_element_type=jnp.float32)

        head_tail(accp_ref, w1p_ref, op_ref)
        head_tail(accg_ref, w1g_ref, og_ref)


# ---------------------------------------------------------------------------
# Parameters (deterministic, kaiming_normal_ like the module __init__).
# ---------------------------------------------------------------------------
def init_params(key):
    k0, k1, k2, k3 = jax.random.split(key, 4)

    def kaiming(k, fan_in, shape):
        std = math.sqrt(2.0 / fan_in)
        return std * jax.random.normal(k, shape, dtype=jnp.float32)

    # PyTorch conv weights are [out, in, 1, 1]; stored here as [in, out]
    # (conv0, bf16 for the MXU) and [1, in] (conv1 row vector, f32).
    return {
        "push_w0": kaiming(k0, 2048, (2048, CONV0_OUT)).astype(jnp.bfloat16),
        "push_w1": kaiming(k1, CONV0_OUT, (1, CONV0_OUT)),
        "grasp_w0": kaiming(k2, 2048, (2048, CONV0_OUT)).astype(jnp.bfloat16),
        "grasp_w1": kaiming(k3, CONV0_OUT, (1, CONV0_OUT)),
    }


# ---------------------------------------------------------------------------
# Forward (non-volatile / specific_rotation path of push_grasp_net.forward).
#
# interm_push_feat / interm_grasp_feat: [B, H, W, 2048] -- the reference's
# NCHW trunk features in TPU-native NHWC layout (the untranslated DenseNet
# trunks would emit NHWC on TPU), so no stack/transpose HBM round trip is
# needed before the kernel; the [P, C] flatten below is a free reshape.
# ---------------------------------------------------------------------------
@functools.partial(jax.jit, static_argnames=("specific_rotation",))
def push_grasp_net_forward(params, interm_push_feat, interm_grasp_feat,
                           specific_rotation):
    B, H, W, C = interm_push_feat.shape
    Ho, Wo = H * UPSAMPLE_SCALE, W * UPSAMPLE_SCALE
    P = B * H * W
    assert P % 8 == 0, "B*H*W must be a multiple of 8 (sublane-aligned BN stats)"
    tk = min(TK, C)
    assert C % tk == 0

    rotate_theta = np.radians(specific_rotation * (360.0 / NUM_ROTATIONS))
    affine_mat_after = np.asarray(
        [[np.cos(rotate_theta), np.sin(rotate_theta), 0.0],
         [-np.sin(rotate_theta), np.cos(rotate_theta), 0.0]],
        dtype=np.float64,
    )
    # Static rotation -> host-precomputed separable rotate+upsample operators.
    rbt, awe, ahw = _build_separable_operators(
        B, H, W, UPSAMPLE_SCALE, affine_mat_after)

    xp = interm_push_feat.reshape(P, C)      # free reshapes (NHWC row-major)
    xg = interm_grasp_feat.reshape(P, C)

    out_p, out_g = pl.pallas_call(
        _fused_heads_kernel,
        out_shape=(jax.ShapeDtypeStruct((B * Ho, Wo), jnp.float32),
                   jax.ShapeDtypeStruct((B * Ho, Wo), jnp.float32)),
        grid=(C // tk,),
        in_specs=[
            pl.BlockSpec((P, tk), lambda k: (0, k)),              # push feats
            pl.BlockSpec((P, tk), lambda k: (0, k)),              # grasp feats
            pl.BlockSpec((tk, CONV0_OUT), lambda k: (k, 0)),      # push conv0
            pl.BlockSpec((tk, CONV0_OUT), lambda k: (k, 0)),      # grasp conv0
            pl.BlockSpec((1, CONV0_OUT), lambda k: (0, 0)),       # push conv1
            pl.BlockSpec((1, CONV0_OUT), lambda k: (0, 0)),       # grasp conv1
            pl.BlockSpec((P, P), lambda k: (0, 0)),               # rotate gather
            pl.BlockSpec((P, Wo), lambda k: (0, 0)),              # column weights
            pl.BlockSpec((B * Ho, P), lambda k: (0, 0)),          # row weights
        ],
        out_specs=(pl.BlockSpec((B * Ho, Wo), lambda k: (0, 0)),
                   pl.BlockSpec((B * Ho, Wo), lambda k: (0, 0))),
        scratch_shapes=[pltpu.VMEM((P, CONV0_OUT), jnp.float32),
                        pltpu.VMEM((P, CONV0_OUT), jnp.float32)],
        compiler_params=pltpu.CompilerParams(
            dimension_semantics=("arbitrary",)),                  # K reduction
    )(xp, xg,
      params["push_w0"], params["grasp_w0"],
      params["push_w1"], params["grasp_w1"],
      rbt, awe, ahw)

    push_out = out_p.reshape(B, 1, Ho, Wo)    # free reshape (rows are b-major)
    grasp_out = out_g.reshape(B, 1, Ho, Wo)

    output_prob = [[push_out, grasp_out]]
    interm_feat = [[interm_push_feat, interm_grasp_feat]]
    return output_prob, interm_feat


if __name__ == "__main__":
    key = jax.random.PRNGKey(0)
    kp, kf1, kf2 = jax.random.split(key, 3)

    # Trunk-feature shapes (DenseNet stride-32 map, concat of color+depth).
    B, Hf, Wf, C = 2, 4, 4, 2048
    interm_push_feat = jax.random.normal(kf1, (B, Hf, Wf, C), dtype=jnp.float32)
    interm_grasp_feat = jax.random.normal(kf2, (B, Hf, Wf, C), dtype=jnp.float32)

    params = init_params(kp)

    output_prob, interm_feat = push_grasp_net_forward(
        params, interm_push_feat, interm_grasp_feat, specific_rotation=3)

    push_out, grasp_out = output_prob[0]
    jax.block_until_ready(push_out)
    jax.block_until_ready(grasp_out)

    assert push_out.shape == (B, 1, Hf * 16, Wf * 16)
    assert grasp_out.shape == (B, 1, Hf * 16, Wf * 16)
    assert bool(jnp.isfinite(push_out).all())
    assert bool(jnp.isfinite(grasp_out).all())
    print("KERNEL_OK")
</pallas_src>

<mosaic_0001>
module attributes {stable_mosaic.version = 11 : i64} {
  func.func @_fused_heads_kernel(%arg0: i32, %arg1: memref<32x512xf32, #tpu.memory_space<vmem>>, %arg2: memref<32x512xf32, #tpu.memory_space<vmem>>, %arg3: memref<512x64xbf16, #tpu.memory_space<vmem>>, %arg4: memref<512x64xbf16, #tpu.memory_space<vmem>>, %arg5: memref<1x64xf32, #tpu.memory_space<vmem>>, %arg6: memref<1x64xf32, #tpu.memory_space<vmem>>, %arg7: memref<32x32xbf16, #tpu.memory_space<vmem>>, %arg8: memref<32x64xf32, #tpu.memory_space<vmem>>, %arg9: memref<128x32xbf16, #tpu.memory_space<vmem>>, %arg10: memref<128x64xf32, #tpu.memory_space<vmem>>, %arg11: memref<128x64xf32, #tpu.memory_space<vmem>>, %arg12: memref<32x64xf32, #tpu.memory_space<vmem>>, %arg13: memref<32x64xf32, #tpu.memory_space<vmem>>) attributes {dimension_semantics = [#tpu.dimension_semantics<arbitrary>], iteration_bounds = array<i64: 4>, scalar_prefetch = 0 : i64, scratch_operands = 2 : i64, tpu.core_type = #tpu.core_type<tc>, window_params = [{transform_indices = @transform_0, window_bounds = array<i64: 32, 512>}, {transform_indices = @transform_1, window_bounds = array<i64: 32, 512>}, {transform_indices = @transform_2, window_bounds = array<i64: 512, 64>}, {transform_indices = @transform_3, window_bounds = array<i64: 512, 64>}, {pipeline_mode = #tpu.pipeline_mode<synchronous>, transform_indices = @transform_4, window_bounds = array<i64: 1, 64>}, {pipeline_mode = #tpu.pipeline_mode<synchronous>, transform_indices = @transform_5, window_bounds = array<i64: 1, 64>}, {pipeline_mode = #tpu.pipeline_mode<synchronous>, transform_indices = @transform_6, window_bounds = array<i64: 32, 32>}, {pipeline_mode = #tpu.pipeline_mode<synchronous>, transform_indices = @transform_7, window_bounds = array<i64: 32, 64>}, {pipeline_mode = #tpu.pipeline_mode<synchronous>, transform_indices = @transform_8, window_bounds = array<i64: 128, 32>}, {pipeline_mode = #tpu.pipeline_mode<synchronous>, transform_indices = @transform_9, window_bounds = array<i64: 128, 64>}, {pipeline_mode = #tpu.pipeline_mode<synchronous>, transform_indices = @transform_10, window_bounds = array<i64: 128, 64>}]} {
    %c0_i32 = arith.constant 0 : i32
    %0 = arith.cmpi eq, %arg0, %c0_i32 : i32
    %1 = arith.extui %0 : i1 to i32
    %c0_i32_0 = arith.constant 0 : i32
    %2 = arith.cmpi ne, %1, %c0_i32_0 : i32
    scf.if %2 {
      %cst_32 = arith.constant 0.000000e+00 : f32
      %64 = vector.broadcast %cst_32 : f32 to vector<32x64xf32>
      %c0_33 = arith.constant 0 : index
      %c0_34 = arith.constant 0 : index
      %65 = vector.load %arg12[%c0_33, %c0_34] : memref<32x64xf32, #tpu.memory_space<vmem>>, vector<32x64xf32>
      tpu.vector_store %arg12[%c0_33, %c0_34], %64 {strides = array<i32>} : memref<32x64xf32, #tpu.memory_space<vmem>>, vector<32x64xf32>,
      %cst_35 = arith.constant 0.000000e+00 : f32
      %66 = vector.broadcast %cst_35 : f32 to vector<32x64xf32>
      %c0_36 = arith.constant 0 : index
      %c0_37 = arith.constant 0 : index
      %67 = vector.load %arg13[%c0_36, %c0_37] : memref<32x64xf32, #tpu.memory_space<vmem>>, vector<32x64xf32>
      tpu.vector_store %arg13[%c0_36, %c0_37], %66 {strides = array<i32>} : memref<32x64xf32, #tpu.memory_space<vmem>>, vector<32x64xf32>,
    } else {
    }
    %c0 = arith.constant 0 : index
    %c0_1 = arith.constant 0 : index
    %3 = vector.load %arg1[%c0, %c0_1] : memref<32x512xf32, #tpu.memory_space<vmem>>, vector<32x512xf32>
    %cst = arith.constant dense<0.000000e+00> : vector<512xf32>
    %4 = vector.multi_reduction <add>, %3, %cst [0] : vector<32x512xf32> to vector<512xf32>
    %5 = vector.shape_cast %4 : vector<512xf32> to vector<1x512xf32>
    %cst_2 = arith.constant 3.125000e-02 : f32
    %6 = vector.broadcast %cst_2 : f32 to vector<1x512xf32>
    %7 = arith.mulf %5, %6 : vector<1x512xf32>
    %8 = arith.mulf %3, %3 : vector<32x512xf32>
    %cst_3 = arith.constant dense<0.000000e+00> : vector<512xf32>
    %9 = vector.multi_reduction <add>, %8, %cst_3 [0] : vector<32x512xf32> to vector<512xf32>
    %10 = vector.shape_cast %9 : vector<512xf32> to vector<1x512xf32>
    %cst_4 = arith.constant 3.125000e-02 : f32
    %11 = vector.broadcast %cst_4 : f32 to vector<1x512xf32>
    %12 = arith.mulf %10, %11 : vector<1x512xf32>
    %13 = arith.mulf %7, %7 : vector<1x512xf32>
    %14 = arith.subf %12, %13 : vector<1x512xf32>
    %cst_5 = arith.constant 0.000000e+00 : f32
    %15 = vector.broadcast %cst_5 : f32 to vector<1x512xf32>
    %16 = arith.maximumf %14, %15 : vector<1x512xf32>
    %17 = vector.broadcast %7 : vector<1x512xf32> to vector<32x512xf32>
    %18 = arith.subf %3, %17 : vector<32x512xf32>
    %cst_6 = arith.constant 9.99999974E-6 : f32
    %19 = vector.broadcast %cst_6 : f32 to vector<1x512xf32>
    %20 = arith.addf %16, %19 : vector<1x512xf32>
    %21 = math.rsqrt %20 : vector<1x512xf32>
    %22 = vector.broadcast %21 : vector<1x512xf32> to vector<32x512xf32>
    %23 = arith.mulf %18, %22 : vector<32x512xf32>
    %cst_7 = arith.constant 0.000000e+00 : f32
    %24 = vector.broadcast %cst_7 : f32 to vector<32x512xf32>
    %25 = arith.maximumf %23, %24 : vector<32x512xf32>
    %c0_8 = arith.constant 0 : index
    %c0_9 = arith.constant 0 : index
    %26 = vector.load %arg12[%c0_8, %c0_9] : memref<32x64xf32, #tpu.memory_space<vmem>>, vector<32x64xf32>
    %27 = arith.truncf %25 : vector<32x512xf32> to vector<32x512xbf16>
    %c0_10 = arith.constant 0 : index
    %c0_11 = arith.constant 0 : index
    %28 = vector.load %arg3[%c0_10, %c0_11] : memref<512x64xbf16, #tpu.memory_space<vmem>>, vector<512x64xbf16>
    %cst_12 = arith.constant dense<0.000000e+00> : vector<32x64xf32>
    %29 = tpu.matmul %27, %28, %cst_12 {dimension_numbers = #tpu.dot_dimension_numbers<[1], [0], [0], [1], [0, 0, 1, 1], [], []>} : vector<32x512xbf16>, vector<512x64xbf16>, vector<32x64xf32> -> vector<32x64xf32>
    %30 = arith.addf %26, %29 : vector<32x64xf32>
    %c0_13 = arith.constant 0 : index
    %c0_14 = arith.constant 0 : index
    %31 = vector.load %arg12[%c0_13, %c0_14] : memref<32x64xf32, #tpu.memory_space<vmem>>, vector<32x64xf32>
    tpu.vector_store %arg12[%c0_13, %c0_14], %30 {strides = array<i32>} : memref<32x64xf32, #tpu.memory_space<vmem>>, vector<32x64xf32>,
    %c0_15 = arith.constant 0 : index
    %c0_16 = arith.constant 0 : index
    %32 = vector.load %arg2[%c0_15, %c0_16] : memref<32x512xf32, #tpu.memory_space<vmem>>, vector<32x512xf32>
    %cst_17 = arith.constant dense<0.000000e+00> : vector<512xf32>
    %33 = vector.multi_reduction <add>, %32, %cst_17 [0] : vector<32x512xf32> to vector<512xf32>
    %34 = vector.shape_cast %33 : vector<512xf32> to vector<1x512xf32>
    %cst_18 = arith.constant 3.125000e-02 : f32
    %35 = vector.broadcast %cst_18 : f32 to vector<1x512xf32>
    %36 = arith.mulf %34, %35 : vector<1x512xf32>
    %37 = arith.mulf %32, %32 : vector<32x512xf32>
    %cst_19 = arith.constant dense<0.000000e+00> : vector<512xf32>
    %38 = vector.multi_reduction <add>, %37, %cst_19 [0] : vector<32x512xf32> to vector<512xf32>
    %39 = vector.shape_cast %38 : vector<512xf32> to vector<1x512xf32>
    %cst_20 = arith.constant 3.125000e-02 : f32
    %40 = vector.broadcast %cst_20 : f32 to vector<1x512xf32>
    %41 = arith.mulf %39, %40 : vector<1x512xf32>
    %42 = arith.mulf %36, %36 : vector<1x512xf32>
    %43 = arith.subf %41, %42 : vector<1x512xf32>
    %cst_21 = arith.constant 0.000000e+00 : f32
    %44 = vector.broadcast %cst_21 : f32 to vector<1x512xf32>
    %45 = arith.maximumf %43, %44 : vector<1x512xf32>
    %46 = vector.broadcast %36 : vector<1x512xf32> to vector<32x512xf32>
    %47 = arith.subf %32, %46 : vector<32x512xf32>
    %cst_22 = arith.constant 9.99999974E-6 : f32
    %48 = vector.broadcast %cst_22 : f32 to vector<1x512xf32>
    %49 = arith.addf %45, %48 : vector<1x512xf32>
    %50 = math.rsqrt %49 : vector<1x512xf32>
    %51 = vector.broadcast %50 : vector<1x512xf32> to vector<32x512xf32>
    %52 = arith.mulf %47, %51 : vector<32x512xf32>
    %cst_23 = arith.constant 0.000000e+00 : f32
    %53 = vector.broadcast %cst_23 : f32 to vector<32x512xf32>
    %54 = arith.maximumf %52, %53 : vector<32x512xf32>
    %c0_24 = arith.constant 0 : index
    %c0_25 = arith.constant 0 : index
    %55 = vector.load %arg13[%c0_24, %c0_25] : memref<32x64xf32, #tpu.memory_space<vmem>>, vector<32x64xf32>
    %56 = arith.truncf %54 : vector<32x512xf32> to vector<32x512xbf16>
    %c0_26 = arith.constant 0 : index
    %c0_27 = arith.constant 0 : index
    %57 = vector.load %arg4[%c0_26, %c0_27] : memref<512x64xbf16, #tpu.memory_space<vmem>>, vector<512x64xbf16>
    %cst_28 = arith.constant dense<0.000000e+00> : vector<32x64xf32>
    %58 = tpu.matmul %56, %57, %cst_28 {dimension_numbers = #tpu.dot_dimension_numbers<[1], [0], [0], [1], [0, 0, 1, 1], [], []>} : vector<32x512xbf16>, vector<512x64xbf16>, vector<32x64xf32> -> vector<32x64xf32>
    %59 = arith.addf %55, %58 : vector<32x64xf32>
    %c0_29 = arith.constant 0 : index
    %c0_30 = arith.constant 0 : index
    %60 = vector.load %arg13[%c0_29, %c0_30] : memref<32x64xf32, #tpu.memory_space<vmem>>, vector<32x64xf32>
    tpu.vector_store %arg13[%c0_29, %c0_30], %59 {strides = array<i32>} : memref<32x64xf32, #tpu.memory_space<vmem>>, vector<32x64xf32>,
    %c3_i32 = arith.constant 3 : i32
    %61 = arith.cmpi eq, %arg0, %c3_i32 : i32
    %62 = arith.extui %61 : i1 to i32
    %c0_i32_31 = arith.constant 0 : i32
    %63 = arith.cmpi ne, %62, %c0_i32_31 : i32
    scf.if %63 {
      %c0_32 = arith.constant 0 : index
      %c0_33 = arith.constant 0 : index
      %64 = vector.load %arg12[%c0_32, %c0_33] : memref<32x64xf32, #tpu.memory_space<vmem>>, vector<32x64xf32>
      %cst_34 = arith.constant dense<0.000000e+00> : vector<64xf32>
      %65 = vector.multi_reduction <add>, %64, %cst_34 [0] : vector<32x64xf32> to vector<64xf32>
      %66 = vector.shape_cast %65 : vector<64xf32> to vector<1x64xf32>
      %cst_35 = arith.constant 3.125000e-02 : f32
      %67 = vector.broadcast %cst_35 : f32 to vector<1x64xf32>
      %68 = arith.mulf %66, %67 : vector<1x64xf32>
      %69 = arith.mulf %64, %64 : vector<32x64xf32>
      %cst_36 = arith.constant dense<0.000000e+00> : vector<64xf32>
      %70 = vector.multi_reduction <add>, %69, %cst_36 [0] : vector<32x64xf32> to vector<64xf32>
      %71 = vector.shape_cast %70 : vector<64xf32> to vector<1x64xf32>
      %cst_37 = arith.constant 3.125000e-02 : f32
      %72 = vector.broadcast %cst_37 : f32 to vector<1x64xf32>
      %73 = arith.mulf %71, %72 : vector<1x64xf32>
      %74 = arith.mulf %68, %68 : vector<1x64xf32>
      %75 = arith.subf %73, %74 : vector<1x64xf32>
      %cst_38 = arith.constant 0.000000e+00 : f32
      %76 = vector.broadcast %cst_38 : f32 to vector<1x64xf32>
      %77 = arith.maximumf %75, %76 : vector<1x64xf32>
      %78 = vector.broadcast %68 : vector<1x64xf32> to vector<32x64xf32>
      %79 = arith.subf %64, %78 : vector<32x64xf32>
      %cst_39 = arith.constant 9.99999974E-6 : f32
      %80 = vector.broadcast %cst_39 : f32 to vector<1x64xf32>
      %81 = arith.addf %77, %80 : vector<1x64xf32>
      %82 = math.rsqrt %81 : vector<1x64xf32>
      %83 = vector.broadcast %82 : vector<1x64xf32> to vector<32x64xf32>
      %84 = arith.mulf %79, %83 : vector<32x64xf32>
      %cst_40 = arith.constant 0.000000e+00 : f32
      %85 = vector.broadcast %cst_40 : f32 to vector<32x64xf32>
      %86 = arith.maximumf %84, %85 : vector<32x64xf32>
      %c0_41 = arith.constant 0 : index
      %c0_42 = arith.constant 0 : index
      %87 = vector.load %arg7[%c0_41, %c0_42] : memref<32x32xbf16, #tpu.memory_space<vmem>>, vector<32x32xbf16>
      %88 = arith.truncf %86 : vector<32x64xf32> to vector<32x64xbf16>
      %cst_43 = arith.constant dense<0.000000e+00> : vector<32x64xf32>
      %89 = tpu.matmul %87, %88, %cst_43 {dimension_numbers = #tpu.dot_dimension_numbers<[1], [0], [0], [1], [0, 0, 1, 1], [], []>} : vector<32x32xbf16>, vector<32x64xbf16>, vector<32x64xf32> -> vector<32x64xf32>
      %c0_44 = arith.constant 0 : index
      %c0_45 = arith.constant 0 : index
      %90 = vector.load %arg5[%c0_44, %c0_45] : memref<1x64xf32, #tpu.memory_space<vmem>>, vector<1x64xf32>
      %91 = vector.broadcast %90 : vector<1x64xf32> to vector<32x64xf32>
      %92 = arith.mulf %89, %91 : vector<32x64xf32>
      %cst_46 = arith.constant dense<0.000000e+00> : vector<32xf32>
      %93 = vector.multi_reduction <add>, %92, %cst_46 [1] : vector<32x64xf32> to vector<32xf32>
      %94 = vector.shape_cast %93 : vector<32xf32> to vector<32x1xf32>
      %c0_47 = arith.constant 0 : index
      %c0_48 = arith.constant 0 : index
      %95 = vector.load %arg8[%c0_47, %c0_48] : memref<32x64xf32, #tpu.memory_space<vmem>>, vector<32x64xf32>
      %96 = vector.broadcast %94 : vector<32x1xf32> to vector<32x64xf32>
      %97 = arith.mulf %96, %95 : vector<32x64xf32>
      %98 = arith.truncf %97 : vector<32x64xf32> to vector<32x64xbf16>
      %c0_49 = arith.constant 0 : index
      %c0_50 = arith.constant 0 : index
      %99 = vector.load %arg9[%c0_49, %c0_50] : memref<128x32xbf16, #tpu.memory_space<vmem>>, vector<128x32xbf16>
      %cst_51 = arith.constant dense<0.000000e+00> : vector<128x64xf32>
      %100 = tpu.matmul %99, %98, %cst_51 {dimension_numbers = #tpu.dot_dimension_numbers<[1], [0], [0], [1], [0, 0, 1, 1], [], []>} : vector<128x32xbf16>, vector<32x64xbf16>, vector<128x64xf32> -> vector<128x64xf32>
      %c0_52 = arith.constant 0 : index
      %c0_53 = arith.constant 0 : index
      %101 = vector.load %arg10[%c0_52, %c0_53] : memref<128x64xf32, #tpu.memory_space<vmem>>, vector<128x64xf32>
      tpu.vector_store %arg10[%c0_52, %c0_53], %100 {strides = array<i32>} : memref<128x64xf32, #tpu.memory_space<vmem>>, vector<128x64xf32>,
      %c0_54 = arith.constant 0 : index
      %c0_55 = arith.constant 0 : index
      %102 = vector.load %arg13[%c0_54, %c0_55] : memref<32x64xf32, #tpu.memory_space<vmem>>, vector<32x64xf32>
      %cst_56 = arith.constant dense<0.000000e+00> : vector<64xf32>
      %103 = vector.multi_reduction <add>, %102, %cst_56 [0] : vector<32x64xf32> to vector<64xf32>
      %104 = vector.shape_cast %103 : vector<64xf32> to vector<1x64xf32>
      %cst_57 = arith.constant 3.125000e-02 : f32
      %105 = vector.broadcast %cst_57 : f32 to vector<1x64xf32>
      %106 = arith.mulf %104, %105 : vector<1x64xf32>
      %107 = arith.mulf %102, %102 : vector<32x64xf32>
      %cst_58 = arith.constant dense<0.000000e+00> : vector<64xf32>
      %108 = vector.multi_reduction <add>, %107, %cst_58 [0] : vector<32x64xf32> to vector<64xf32>
      %109 = vector.shape_cast %108 : vector<64xf32> to vector<1x64xf32>
      %cst_59 = arith.constant 3.125000e-02 : f32
      %110 = vector.broadcast %cst_59 : f32 to vector<1x64xf32>
      %111 = arith.mulf %109, %110 : vector<1x64xf32>
      %112 = arith.mulf %106, %106 : vector<1x64xf32>
      %113 = arith.subf %111, %112 : vector<1x64xf32>
      %cst_60 = arith.constant 0.000000e+00 : f32
      %114 = vector.broadcast %cst_60 : f32 to vector<1x64xf32>
      %115 = arith.maximumf %113, %114 : vector<1x64xf32>
      %116 = vector.broadcast %106 : vector<1x64xf32> to vector<32x64xf32>
      %117 = arith.subf %102, %116 : vector<32x64xf32>
      %cst_61 = arith.constant 9.99999974E-6 : f32
      %118 = vector.broadcast %cst_61 : f32 to vector<1x64xf32>
      %119 = arith.addf %115, %118 : vector<1x64xf32>
      %120 = math.rsqrt %119 : vector<1x64xf32>
      %121 = vector.broadcast %120 : vector<1x64xf32> to vector<32x64xf32>
      %122 = arith.mulf %117, %121 : vector<32x64xf32>
      %cst_62 = arith.constant 0.000000e+00 : f32
      %123 = vector.broadcast %cst_62 : f32 to vector<32x64xf32>
      %124 = arith.maximumf %122, %123 : vector<32x64xf32>
      %c0_63 = arith.constant 0 : index
      %c0_64 = arith.constant 0 : index
      %125 = vector.load %arg7[%c0_63, %c0_64] : memref<32x32xbf16, #tpu.memory_space<vmem>>, vector<32x32xbf16>
      %126 = arith.truncf %124 : vector<32x64xf32> to vector<32x64xbf16>
      %cst_65 = arith.constant dense<0.000000e+00> : vector<32x64xf32>
      %127 = tpu.matmul %125, %126, %cst_65 {dimension_numbers = #tpu.dot_dimension_numbers<[1], [0], [0], [1], [0, 0, 1, 1], [], []>} : vector<32x32xbf16>, vector<32x64xbf16>, vector<32x64xf32> -> vector<32x64xf32>
      %c0_66 = arith.constant 0 : index
      %c0_67 = arith.constant 0 : index
      %128 = vector.load %arg6[%c0_66, %c0_67] : memref<1x64xf32, #tpu.memory_space<vmem>>, vector<1x64xf32>
      %129 = vector.broadcast %128 : vector<1x64xf32> to vector<32x64xf32>
      %130 = arith.mulf %127, %129 : vector<32x64xf32>
      %cst_68 = arith.constant dense<0.000000e+00> : vector<32xf32>
      %131 = vector.multi_reduction <add>, %130, %cst_68 [1] : vector<32x64xf32> to vector<32xf32>
      %132 = vector.shape_cast %131 : vector<32xf32> to vector<32x1xf32>
      %c0_69 = arith.constant 0 : index
      %c0_70 = arith.constant 0 : index
      %133 = vector.load %arg8[%c0_69, %c0_70] : memref<32x64xf32, #tpu.memory_space<vmem>>, vector<32x64xf32>
      %134 = vector.broadcast %132 : vector<32x1xf32> to vector<32x64xf32>
      %135 = arith.mulf %134, %133 : vector<32x64xf32>
      %136 = arith.truncf %135 : vector<32x64xf32> to vector<32x64xbf16>
      %c0_71 = arith.constant 0 : index
      %c0_72 = arith.constant 0 : index
      %137 = vector.load %arg9[%c0_71, %c0_72] : memref<128x32xbf16, #tpu.memory_space<vmem>>, vector<128x32xbf16>
      %cst_73 = arith.constant dense<0.000000e+00> : vector<128x64xf32>
      %138 = tpu.matmul %137, %136, %cst_73 {dimension_numbers = #tpu.dot_dimension_numbers<[1], [0], [0], [1], [0, 0, 1, 1], [], []>} : vector<128x32xbf16>, vector<32x64xbf16>, vector<128x64xf32> -> vector<128x64xf32>
      %c0_74 = arith.constant 0 : index
      %c0_75 = arith.constant 0 : index
      %139 = vector.load %arg11[%c0_74, %c0_75] : memref<128x64xf32, #tpu.memory_space<vmem>>, vector<128x64xf32>
      tpu.vector_store %arg11[%c0_74, %c0_75], %138 {strides = array<i32>} : memref<128x64xf32, #tpu.memory_space<vmem>>, vector<128x64xf32>,
    } else {
    }
    return
  }
  func.func @transform_0(%arg0: i32) -> (i32, i32) {
    %c0_i32 = arith.constant 0 : i32
    %c0_i32_0 = arith.constant 0 : i32
    return %c0_i32, %arg0 : i32, i32
  }
  func.func @transform_1(%arg0: i32) -> (i32, i32) {
    %c0_i32 = arith.constant 0 : i32
    %c0_i32_0 = arith.constant 0 : i32
    return %c0_i32, %arg0 : i32, i32
  }
  func.func @transform_2(%arg0: i32) -> (i32, i32) {
    %c0_i32 = arith.constant 0 : i32
    %c0_i32_0 = arith.constant 0 : i32
    return %arg0, %c0_i32 : i32, i32
  }
  func.func @transform_3(%arg0: i32) -> (i32, i32) {
    %c0_i32 = arith.constant 0 : i32
    %c0_i32_0 = arith.constant 0 : i32
    return %arg0, %c0_i32 : i32, i32
  }
  func.func @transform_4(%arg0: i32) -> (i32, i32) {
    %c0_i32 = arith.constant 0 : i32
    %c0_i32_0 = arith.constant 0 : i32
    %c0_i32_1 = arith.constant 0 : i32
    return %c0_i32, %c0_i32_0 : i32, i32
  }
  func.func @transform_5(%arg0: i32) -> (i32, i32) {
    %c0_i32 = arith.constant 0 : i32
    %c0_i32_0 = arith.constant 0 : i32
    %c0_i32_1 = arith.constant 0 : i32
    return %c0_i32, %c0_i32_0 : i32, i32
  }
  func.func @transform_6(%arg0: i32) -> (i32, i32) {
    %c0_i32 = arith.constant 0 : i32
    %c0_i32_0 = arith.constant 0 : i32
    %c0_i32_1 = arith.constant 0 : i32
    return %c0_i32, %c0_i32_0 : i32, i32
  }
  func.func @transform_7(%arg0: i32) -> (i32, i32) {
    %c0_i32 = arith.constant 0 : i32
    %c0_i32_0 = arith.constant 0 : i32
    %c0_i32_1 = arith.constant 0 : i32
    return %c0_i32, %c0_i32_0 : i32, i32
  }
  func.func @transform_8(%arg0: i32) -> (i32, i32) {
    %c0_i32 = arith.constant 0 : i32
    %c0_i32_0 = arith.constant 0 : i32
    %c0_i32_1 = arith.constant 0 : i32
    return %c0_i32, %c0_i32_0 : i32, i32
  }
  func.func @transform_9(%arg0: i32) -> (i32, i32) {
    %c0_i32 = arith.constant 0 : i32
    %c0_i32_0 = arith.constant 0 : i32
    %c0_i32_1 = arith.constant 0 : i32
    return %c0_i32, %c0_i32_0 : i32, i32
  }
  func.func @transform_10(%arg0: i32) -> (i32, i32) {
    %c0_i32 = arith.constant 0 : i32
    %c0_i32_0 = arith.constant 0 : i32
    %c0_i32_1 = arith.constant 0 : i32
    return %c0_i32, %c0_i32_0 : i32, i32
  }
}

</mosaic_0001>

<llo_original>
// kernel: push_grasp_net_forward.1
$region0: #{push_grasp_net_forward.1}
  #allocation0 [shape = 'u32[]', space=smem, size = 0x4, offset = 0x4, fixed_abs, tag = 'smem constant byte address 0x4 - core index']
  #allocation1 [shape = 'u32[144,128]{1,0:T(1,128)}', space=vmem, size = 0x12000, scoped, tag = 'internal scratch']
  #allocation2 [shape = 'f32[32,64]{1,0:T(8,128)}', space=vmem, size = 0x4000, scoped, tag = 'scratch operand']
  #allocation3 [shape = 'f32[32,64]{1,0:T(8,128)}', space=vmem, size = 0x4000, scoped, tag = 'scratch operand']
  %s0 = inlined_call_operand.vmem [shape: f32[32,2048], index: 0, kind: input, shape index: {}]
  %s1 = inlined_call_operand.vmem [shape: f32[32,2048], index: 1, kind: input, shape index: {}]
  %s2 = inlined_call_operand.vmem [shape: bf16[2048,64], index: 2, kind: input, shape index: {}]
  %s3 = inlined_call_operand.vmem [shape: bf16[2048,64], index: 3, kind: input, shape index: {}]
  %s4 = inlined_call_operand.vmem [shape: f32[1,64], index: 4, kind: input, shape index: {}]
  %s5 = inlined_call_operand.vmem [shape: f32[1,64], index: 5, kind: input, shape index: {}]
  %s6 = inlined_call_operand.vmem [shape: bf16[32,32], index: 6, kind: input, shape index: {}]
  %s7 = inlined_call_operand.vmem [shape: f32[32,64], index: 7, kind: input, shape index: {}]
  %s8 = inlined_call_operand.vmem [shape: bf16[128,32], index: 8, kind: input, shape index: {}]
  %s9 = inlined_call_operand.hbm [shape: f32[128,64], index: 9, kind: output, shape index: {0}]
  %s10 = inlined_call_operand.hbm [shape: f32[128,64], index: 10, kind: output, shape index: {1}]
  %11 = xla_tuple %s9, %s10
  %s12 = sld [smem:[#allocation0]]
  $region131: #{push_grasp_net_forward.1} parent=0
    _
  %s14 = ssub.s32 1, %s12
  %s15 = scalar_select 0, %s14, %s12
  $region1: #{push_grasp_net_forward.1} parent=0
    #allocation4 [shape = 'u8[131072]{0}', space=vmem, size = 0x20000, scoped, tag = 'input window, operand 0']
    #allocation5 [shape = 'u8[131072]{0}', space=vmem, size = 0x20000, scoped, tag = 'input window, operand 1']
    #allocation6 [shape = 'u8[65536]{0}', space=vmem, size = 0x10000, scoped, tag = 'output window, operand 0, single buffered']
    #allocation7 [shape = 's32[2]{0}', space=sflag, size = 0x8, scoped, tag = 'scoped memory for push_grasp_net_forward.1']
    #allocation8 [shape = 'u8[65536]{0}', space=vmem, size = 0x10000, scoped, tag = 'output window, operand 1, single buffered']
    #allocation9 [shape = 's32[1]{0}', space=sflag, size = 0x4, scoped, tag = 'scoped memory for push_grasp_net_forward.1']
    %16 = vsyncpa [#allocation7], 0
    %17 = vsyncpa [#allocation9], 0
    loop: start=0, step=1, limit=6
    $region2: #{push_grasp_net_forward.1} parent=1 // loop_pre_header
      _
    $region3: #{push_grasp_net_forward.1} parent=1 // loop_header
      %s19 = sphi 0, %s23
      %p20 = scmp.ge.s32.totalorder %s19, 6
      %s29 = sphi 0, %s31
      %s32 = sphi 0, %s29
      %s33 = sphi 0, %s32
      %s49 = sphi 0, %s33
      %s55 = sphi 0, %s57
      %s58 = sphi 0, %s55
      %s59 = sphi 0, %s58
      %s75 = sphi 0, %s59
      %s81 = sphi 0, %s83
      %s84 = sphi 0, %s81
      %s85 = sphi 0, %s84
      %s101 = sphi 0, %s85
      %s107 = sphi 0, %s109
      %s110 = sphi 0, %s107
      %s111 = sphi 0, %s110
      %s127 = sphi 0, %s111
      %s131 = sphi 0, %s131
      %s133 = sphi 0, %s131
      %s134 = sphi 0, %s133
      %s148 = sphi 0, %s134
      %s152 = sphi 0, %s152
      %s154 = sphi 0, %s152
      %s155 = sphi 0, %s154
      %s169 = sphi 0, %s155
      %s173 = sphi 0, %s173
      %s175 = sphi 0, %s173
      %s176 = sphi 0, %s175
      %s190 = sphi 0, %s176
      %s194 = sphi 0, %s194
      %s196 = sphi 0, %s194
      %s197 = sphi 0, %s196
      %s211 = sphi 0, %s197
      %s215 = sphi 0, %s215
      %s217 = sphi 0, %s215
      %s218 = sphi 0, %s217
      %s232 = sphi 0, %s218
      %s236 = sphi 0, %s236
      %s238 = sphi 0, %s236
      %s239 = sphi 0, %s238
      %s253 = sphi 0, %s239
      %s257 = sphi 0, %s257
      %s259 = sphi 0, %s257
      %s260 = sphi 0, %s259
      %s274 = sphi 0, %s260
    $region4: #{push_grasp_net_forward.1} parent=1 // loop_header_branch
      %22 = sbr.rel (%p20) target = $region8
    $region5: #{push_grasp_net_forward.1} parent=1 // loop_body
      %s24 = ssub.s32 %s19, 1
      %s25 = ssub.s32 %s19, 2
      %s26 = sadd.s32 %s19, 1
      %s27 = ssub.s32 %s19, %s26
      %p28 = scmp.eq.s32.totalorder %s27, 0
      %s30 = sadd.s32 %s29, 1
      %s31 = scalar_select %p28, %s29, %s30
      %p34 = pneg %p28
      %p35 = scmp.eq.s32.totalorder %s19, 3
      %p36 = por %p34, %p35
      %p37 = scmp.ne.s32.totalorder %s29, %s32
      %p38 = scmp.eq.s32.totalorder %s19, 0
      %p39 = por %p37, %p38
      %p40 = scmp.ne.s32.totalorder %s29, %s32
      %p41 = scmp.eq.s32.totalorder %s24, 3
      %p42 = por %p40, %p41
      %p43 = scmp.ne.s32.totalorder %s32, %s33
      %p44 = scmp.eq.s32.totalorder %s24, 0
      %p45 = por %p43, %p44
      %p46 = scmp.ne.s32.totalorder %s32, %s33
      %p47 = scmp.eq.s32.totalorder %s25, 3
      %p48 = por %p46, %p47
      %p50 = scmp.ne.s32.totalorder %s33, %s49
      %p51 = scmp.eq.s32.totalorder %s25, 0
      %p52 = por %p50, %p51
      %s53 = ssub.s32 %s19, %s26
      %p54 = scmp.eq.s32.totalorder %s53, 0
      %s56 = sadd.s32 %s55, 1
      %s57 = scalar_select %p54, %s55, %s56
      %p60 = pneg %p54
      %p61 = scmp.eq.s32.totalorder %s19, 3
      %p62 = por %p60, %p61
      %p63 = scmp.ne.s32.totalorder %s55, %s58
      %p64 = scmp.eq.s32.totalorder %s19, 0
      %p65 = por %p63, %p64
      %p66 = scmp.ne.s32.totalorder %s55, %s58
      %p67 = scmp.eq.s32.totalorder %s24, 3
      %p68 = por %p66, %p67
      %p69 = scmp.ne.s32.totalorder %s58, %s59
      %p70 = scmp.eq.s32.totalorder %s24, 0
      %p71 = por %p69, %p70
      %p72 = scmp.ne.s32.totalorder %s58, %s59
      %p73 = scmp.eq.s32.totalorder %s25, 3
      %p74 = por %p72, %p73
      %p76 = scmp.ne.s32.totalorder %s59, %s75
      %p77 = scmp.eq.s32.totalorder %s25, 0
      %p78 = por %p76, %p77
      %s79 = ssub.s32 %s19, %s26
      %p80 = scmp.eq.s32.totalorder %s79, 0
      %s82 = sadd.s32 %s81, 1
      %s83 = scalar_select %p80, %s81, %s82
      %p86 = pneg %p80
      %p87 = scmp.eq.s32.totalorder %s19, 3
      %p88 = por %p86, %p87
      %p89 = scmp.ne.s32.totalorder %s81, %s84
      %p90 = scmp.eq.s32.totalorder %s19, 0
      %p91 = por %p89, %p90
      %p92 = scmp.ne.s32.totalorder %s81, %s84
      %p93 = scmp.eq.s32.totalorder %s24, 3
      %p94 = por %p92, %p93
      %p95 = scmp.ne.s32.totalorder %s84, %s85
      %p96 = scmp.eq.s32.totalorder %s24, 0
      %p97 = por %p95, %p96
      %p98 = scmp.ne.s32.totalorder %s84, %s85
      %p99 = scmp.eq.s32.totalorder %s25, 3
      %p100 = por %p98, %p99
      %p102 = scmp.ne.s32.totalorder %s85, %s101
      %p103 = scmp.eq.s32.totalorder %s25, 0
      %p104 = por %p102, %p103
      %s105 = ssub.s32 %s19, %s26
      %p106 = scmp.eq.s32.totalorder %s105, 0
      %s108 = sadd.s32 %s107, 1
      %s109 = scalar_select %p106, %s107, %s108
      %p112 = pneg %p106
      %p113 = scmp.eq.s32.totalorder %s19, 3
      %p114 = por %p112, %p113
      %p115 = scmp.ne.s32.totalorder %s107, %s110
      %p116 = scmp.eq.s32.totalorder %s19, 0
      %p117 = por %p115, %p116
      %p118 = scmp.ne.s32.totalorder %s107, %s110
      %p119 = scmp.eq.s32.totalorder %s24, 3
      %p120 = por %p118, %p119
      %p121 = scmp.ne.s32.totalorder %s110, %s111
      %p122 = scmp.eq.s32.totalorder %s24, 0
      %p123 = por %p121, %p122
      %p124 = scmp.ne.s32.totalorder %s110, %s111
      %p125 = scmp.eq.s32.totalorder %s25, 3
      %p126 = por %p124, %p125
      %p128 = scmp.ne.s32.totalorder %s111, %s127
      %p129 = scmp.eq.s32.totalorder %s25, 0
      %p130 = por %p128, %p129
      %s132 = sadd.s32 %s131, 1
      %p135 = scmp.eq.s32.totalorder %s19, 3
      %p136 = scmp.ne.s32.totalorder %s131, %s133
      %p137 = scmp.eq.s32.totalorder %s19, 0
      %p138 = por %p136, %p137
      %p139 = scmp.ne.s32.totalorder %s131, %s133
      %p140 = scmp.eq.s32.totalorder %s24, 3
      %p141 = por %p139, %p140
      %p142 = scmp.ne.s32.totalorder %s133, %s134
      %p143 = scmp.eq.s32.totalorder %s24, 0
      %p144 = por %p142, %p143
      %p145 = scmp.ne.s32.totalorder %s133, %s134
      %p146 = scmp.eq.s32.totalorder %s25, 3
      %p147 = por %p145, %p146
      %p149 = scmp.ne.s32.totalorder %s134, %s148
      %p150 = scmp.eq.s32.totalorder %s25, 0
      %p151 = por %p149, %p150
      %s153 = sadd.s32 %s152, 1
      %p156 = scmp.eq.s32.totalorder %s19, 3
      %p157 = scmp.ne.s32.totalorder %s152, %s154
      %p158 = scmp.eq.s32.totalorder %s19, 0
      %p159 = por %p157, %p158
      %p160 = scmp.ne.s32.totalorder %s152, %s154
      %p161 = scmp.eq.s32.totalorder %s24, 3
      %p162 = por %p160, %p161
      %p163 = scmp.ne.s32.totalorder %s154, %s155
      %p164 = scmp.eq.s32.totalorder %s24, 0
      %p165 = por %p163, %p164
      %p166 = scmp.ne.s32.totalorder %s154, %s155
      %p167 = scmp.eq.s32.totalorder %s25, 3
      %p168 = por %p166, %p167
      %p170 = scmp.ne.s32.totalorder %s155, %s169
      %p171 = scmp.eq.s32.totalorder %s25, 0
      %p172 = por %p170, %p171
      %s174 = sadd.s32 %s173, 1
      %p177 = scmp.eq.s32.totalorder %s19, 3
      %p178 = scmp.ne.s32.totalorder %s173, %s175
      %p179 = scmp.eq.s32.totalorder %s19, 0
      %p180 = por %p178, %p179
      %p181 = scmp.ne.s32.totalorder %s173, %s175
      %p182 = scmp.eq.s32.totalorder %s24, 3
      %p183 = por %p181, %p182
      %p184 = scmp.ne.s32.totalorder %s175, %s176
      %p185 = scmp.eq.s32.totalorder %s24, 0
      %p186 = por %p184, %p185
      %p187 = scmp.ne.s32.totalorder %s175, %s176
      %p188 = scmp.eq.s32.totalorder %s25, 3
      %p189 = por %p187, %p188
      %p191 = scmp.ne.s32.totalorder %s176, %s190
      %p192 = scmp.eq.s32.totalorder %s25, 0
      %p193 = por %p191, %p192
      %s195 = sadd.s32 %s194, 1
      %p198 = scmp.eq.s32.totalorder %s19, 3
      %p199 = scmp.ne.s32.totalorder %s194, %s196
      %p200 = scmp.eq.s32.totalorder %s19, 0
      %p201 = por %p199, %p200
      %p202 = scmp.ne.s32.totalorder %s194, %s196
      %p203 = scmp.eq.s32.totalorder %s24, 3
      %p204 = por %p202, %p203
      %p205 = scmp.ne.s32.totalorder %s196, %s197
      %p206 = scmp.eq.s32.totalorder %s24, 0
      %p207 = por %p205, %p206
      %p208 = scmp.ne.s32.totalorder %s196, %s197
      %p209 = scmp.eq.s32.totalorder %s25, 3
      %p210 = por %p208, %p209
      %p212 = scmp.ne.s32.totalorder %s197, %s211
      %p213 = scmp.eq.s32.totalorder %s25, 0
      %p214 = por %p212, %p213
      %s216 = sadd.s32 %s215, 1
      %p219 = scmp.eq.s32.totalorder %s19, 3
      %p220 = scmp.ne.s32.totalorder %s215, %s217
      %p221 = scmp.eq.s32.totalorder %s19, 0
      %p222 = por %p220, %p221
      %p223 = scmp.ne.s32.totalorder %s215, %s217
      %p224 = scmp.eq.s32.totalorder %s24, 3
      %p225 = por %p223, %p224
      %p226 = scmp.ne.s32.totalorder %s217, %s218
      %p227 = scmp.eq.s32.totalorder %s24, 0
      %p228 = por %p226, %p227
      %p229 = scmp.ne.s32.totalorder %s217, %s218
      %p230 = scmp.eq.s32.totalorder %s25, 3
      %p231 = por %p229, %p230
      %p233 = scmp.ne.s32.totalorder %s218, %s232
      %p234 = scmp.eq.s32.totalorder %s25, 0
      %p235 = por %p233, %p234
      %s237 = sadd.s32 %s236, 1
      %p240 = scmp.eq.s32.totalorder %s19, 3
      %p241 = scmp.ne.s32.totalorder %s236, %s238
      %p242 = scmp.eq.s32.totalorder %s19, 0
      %p243 = por %p241, %p242
      %p244 = scmp.ne.s32.totalorder %s236, %s238
      %p245 = scmp.eq.s32.totalorder %s24, 3
      %p246 = por %p244, %p245
      %p247 = scmp.ne.s32.totalorder %s238, %s239
      %p248 = scmp.eq.s32.totalorder %s24, 0
      %p249 = por %p247, %p248
      %p250 = scmp.ne.s32.totalorder %s238, %s239
      %p251 = scmp.eq.s32.totalorder %s25, 3
      %p252 = por %p250, %p251
      %p254 = scmp.ne.s32.totalorder %s239, %s253
      %p255 = scmp.eq.s32.totalorder %s25, 0
      %p256 = por %p254, %p255
      %s258 = sadd.s32 %s257, 1
      %p261 = scmp.eq.s32.totalorder %s19, 3
      %p262 = scmp.ne.s32.totalorder %s257, %s259
      %p263 = scmp.eq.s32.totalorder %s19, 0
      %p264 = por %p262, %p263
      %p265 = scmp.ne.s32.totalorder %s257, %s259
      %p266 = scmp.eq.s32.totalorder %s24, 3
      %p267 = por %p265, %p266
      %p268 = scmp.ne.s32.totalorder %s259, %s260
      %p269 = scmp.eq.s32.totalorder %s24, 0
      %p270 = por %p268, %p269
      %p271 = scmp.ne.s32.totalorder %s259, %s260
      %p272 = scmp.eq.s32.totalorder %s25, 3
      %p273 = por %p271, %p272
      %p275 = scmp.ne.s32.totalorder %s260, %s274
      %p276 = scmp.eq.s32.totalorder %s25, 0
      %p277 = por %p275, %p276
      %p278 = scmp.le.s32.totalorder 1, %s19
      %p279 = scmp.lt.s32.totalorder %s19, 5
      %p280 = pnand %p278, %p279
      %p281 = pneg %p280
      // Predicated region
      $region9: #{push_grasp_net_forward.1} parent=5 // pred_check
        _
      $region10: #{push_grasp_net_forward.1} parent=5 // pred_check_branch
        %283 = sbr.rel (%p280) target = $region12
      $region11: #{push_grasp_net_forward.1} parent=5 // pred_region
        %s284 = ssub.s32 %s19, 1
        // Predicated region
        $region13: #{push_grasp_net_forward.1} parent=11 // pred_check
          %p285 = pneg %p144
        $region14: #{push_grasp_net_forward.1} parent=11 // pred_check_branch
          %287 = sbr.rel (%p285) target = $region16
        $region15: #{push_grasp_net_forward.1} parent=11 // pred_region
          _
        $region16: #{push_grasp_net_forward.1} parent=11 // pred_fallthru
          _
        // Predicated region
        $region17: #{push_grasp_net_forward.1} parent=11 // pred_check
          %p288 = pneg %p165
        $region18: #{push_grasp_net_forward.1} parent=11 // pred_check_branch
          %290 = sbr.rel (%p288) target = $region20
        $region19: #{push_grasp_net_forward.1} parent=11 // pred_region
          _
        $region20: #{push_grasp_net_forward.1} parent=11 // pred_fallthru
          _
        // Predicated region
        $region21: #{push_grasp_net_forward.1} parent=11 // pred_check
          %p291 = pneg %p186
        $region22: #{push_grasp_net_forward.1} parent=11 // pred_check_branch
          %293 = sbr.rel (%p291) target = $region24
        $region23: #{push_grasp_net_forward.1} parent=11 // pred_region
          _
        $region24: #{push_grasp_net_forward.1} parent=11 // pred_fallthru
          _
        // Predicated region
        $region25: #{push_grasp_net_forward.1} parent=11 // pred_check
          %p294 = pneg %p207
        $region26: #{push_grasp_net_forward.1} parent=11 // pred_check_branch
          %296 = sbr.rel (%p294) target = $region28
        $region27: #{push_grasp_net_forward.1} parent=11 // pred_region
          _
        $region28: #{push_grasp_net_forward.1} parent=11 // pred_fallthru
          _
        // Predicated region
        $region29: #{push_grasp_net_forward.1} parent=11 // pred_check
          %p297 = pneg %p228
        $region30: #{push_grasp_net_forward.1} parent=11 // pred_check_branch
          %299 = sbr.rel (%p297) target = $region32
        $region31: #{push_grasp_net_forward.1} parent=11 // pred_region
          _
        $region32: #{push_grasp_net_forward.1} parent=11 // pred_fallthru
          _
      $region12: #{push_grasp_net_forward.1} parent=5 // pred_fallthru
        _
      %p300 = scmp.lt.s32.totalorder %s19, 4
      // Predicated region
      $region33: #{push_grasp_net_forward.1} parent=5 // pred_check
        %p301 = pneg %p300
      $region34: #{push_grasp_net_forward.1} parent=5 // pred_check_branch
        %303 = sbr.rel (%p301) target = $region36
      $region35: #{push_grasp_net_forward.1} parent=5 // pred_region
        // Predicated region
        $region37: #{push_grasp_net_forward.1} parent=35 // pred_check
          %p304 = pneg %p39
        $region38: #{push_grasp_net_forward.1} parent=35 // pred_check_branch
          %306 = sbr.rel (%p304) target = $region40
        $region39: #{push_grasp_net_forward.1} parent=35 // pred_region
          %s307 = sand.u32 %s29, 1
          %s308 = sand.u32 %s29, 1
          %s309 = smul.addr %s308, 128
          %s310 = scalar_lea.vmem [#allocation4], %s309
          %s311 = smul.u32 4, %s19
          %s312 = smul.addr %s311, 8
          %s313 = scalar_lea.vmem %s0, %s312
          // Predicated region
          $region41: #{push_grasp_net_forward.1} parent=39 // pred_check
            _
          $region42: #{push_grasp_net_forward.1} parent=39 // pred_check_branch
            %315 = sbr.rel (0) target = $region44
          $region43: #{push_grasp_net_forward.1} parent=39 // pred_region
            // Predicated region
            $region45: #{push_grasp_net_forward.1} parent=43 // pred_check
              _
            $region46: #{push_grasp_net_forward.1} parent=43 // pred_check_branch
              %317 = sbr.rel (0) target = $region48
            $region47: #{push_grasp_net_forward.1} parent=43 // pred_region
              loop: start=0, step=1, limit=1
              $region49: #{push_grasp_net_forward.1} parent=47 // loop_pre_header
                _
              $region50: #{push_grasp_net_forward.1} parent=47 // loop_header
                %s319 = sphi 0, %s323
                %p320 = scmp.ge.s32.totalorder %s319, 1
                %s324 = sphi %s313, %s313
                %s325 = sphi %s310, %s310
              $region51: #{push_grasp_net_forward.1} parent=47 // loop_header_branch
                %322 = sbr.rel (%p320) target = $region55
              $region52: #{push_grasp_net_forward.1} parent=47 // loop_body
                %v326 = vld [vmem:[%s324] sm:$0xff]
                %327 = vst [vmem:[%s325] sm:$0xff] %v326
                %v328 = vld [vmem:[%s324 + $0x8] sm:$0xff]
                %329 = vst [vmem:[%s325 + $0x8] sm:$0xff] %v328
                %v330 = vld [vmem:[%s324 + $0x10] sm:$0xff]
                %331 = vst [vmem:[%s325 + $0x10] sm:$0xff] %v330
                %v332 = vld [vmem:[%s324 + $0x18] sm:$0xff]
                %333 = vst [vmem:[%s325 + $0x18] sm:$0xff] %v332
                %v334 = vld [vmem:[%s324 + $0x80] sm:$0xff]
                %335 = vst [vmem:[%s325 + $0x20] sm:$0xff] %v334
                %v336 = vld [vmem:[%s324 + $0x88] sm:$0xff]
                %337 = vst [vmem:[%s325 + $0x28] sm:$0xff] %v336
                %v338 = vld [vmem:[%s324 + $0x90] sm:$0xff]
                %339 = vst [vmem:[%s325 + $0x30] sm:$0xff] %v338
                %v340 = vld [vmem:[%s324 + $0x98] sm:$0xff]
                %341 = vst [vmem:[%s325 + $0x38] sm:$0xff] %v340
                %v342 = vld [vmem:[%s324 + $0x100] sm:$0xff]
                %343 = vst [vmem:[%s325 + $0x40] sm:$0xff] %v342
                %v344 = vld [vmem:[%s324 + $0x108] sm:$0xff]
                %345 = vst [vmem:[%s325 + $0x48] sm:$0xff] %v344
                %v346 = vld [vmem:[%s324 + $0x110] sm:$0xff]
                %347 = vst [vmem:[%s325 + $0x50] sm:$0xff] %v346
                %v348 = vld [vmem:[%s324 + $0x118] sm:$0xff]
                %349 = vst [vmem:[%s325 + $0x58] sm:$0xff] %v348
                %v350 = vld [vmem:[%s324 + $0x180] sm:$0xff]
                %351 = vst [vmem:[%s325 + $0x60] sm:$0xff] %v350
                %v352 = vld [vmem:[%s324 + $0x188] sm:$0xff]
                %353 = vst [vmem:[%s325 + $0x68] sm:$0xff] %v352
                %v354 = vld [vmem:[%s324 + $0x190] sm:$0xff]
                %355 = vst [vmem:[%s325 + $0x70] sm:$0xff] %v354
                %v356 = vld [vmem:[%s324 + $0x198] sm:$0xff]
                %357 = vst [vmem:[%s325 + $0x78] sm:$0xff] %v356
              $region53: #{push_grasp_net_forward.1} parent=47 // loop_footer
                %s323 = sadd.s32 1, %s319
              $region54: #{push_grasp_net_forward.1} parent=47 // loop_footer_branch
                %318 = sbr.rel target = $region50
              $region55: #{push_grasp_net_forward.1} parent=47 // loop_exit
                _
            $region48: #{push_grasp_net_forward.1} parent=43 // pred_fallthru
              _
            // Predicated region
            $region56: #{push_grasp_net_forward.1} parent=43 // pred_check
              _
            $region57: #{push_grasp_net_forward.1} parent=43 // pred_check_branch
              %359 = sbr.rel target = $region59
            $region58: #{push_grasp_net_forward.1} parent=43 // pred_region
              _
            $region59: #{push_grasp_net_forward.1} parent=43 // pred_fallthru
              _
          $region44: #{push_grasp_net_forward.1} parent=39 // pred_fallthru
            _
          %360 = vnop
        $region40: #{push_grasp_net_forward.1} parent=35 // pred_fallthru
          _
        // Predicated region
        $region60: #{push_grasp_net_forward.1} parent=35 // pred_check
          %p361 = pneg %p65
        $region61: #{push_grasp_net_forward.1} parent=35 // pred_check_branch
          %363 = sbr.rel (%p361) target = $region63
        $region62: #{push_grasp_net_forward.1} parent=35 // pred_region
          %s364 = sand.u32 %s55, 1
          %s365 = sand.u32 %s55, 1
          %s366 = smul.addr %s365, 128
          %s367 = scalar_lea.vmem [#allocation5], %s366
          %s368 = smul.u32 4, %s19
          %s369 = smul.addr %s368, 8
          %s370 = scalar_lea.vmem %s1, %s369
          // Predicated region
          $region64: #{push_grasp_net_forward.1} parent=62 // pred_check
            _
          $region65: #{push_grasp_net_forward.1} parent=62 // pred_check_branch
            %372 = sbr.rel (0) target = $region67
          $region66: #{push_grasp_net_forward.1} parent=62 // pred_region
            // Predicated region
            $region68: #{push_grasp_net_forward.1} parent=66 // pred_check
              _
            $region69: #{push_grasp_net_forward.1} parent=66 // pred_check_branch
              %374 = sbr.rel (0) target = $region71
            $region70: #{push_grasp_net_forward.1} parent=66 // pred_region
              loop: start=0, step=1, limit=1
              $region72: #{push_grasp_net_forward.1} parent=70 // loop_pre_header
                _
              $region73: #{push_grasp_net_forward.1} parent=70 // loop_header
                %s376 = sphi 0, %s380
                %p377 = scmp.ge.s32.totalorder %s376, 1
                %s381 = sphi %s370, %s370
                %s382 = sphi %s367, %s367
              $region74: #{push_grasp_net_forward.1} parent=70 // loop_header_branch
                %379 = sbr.rel (%p377) target = $region78
              $region75: #{push_grasp_net_forward.1} parent=70 // loop_body
                %v383 = vld [vmem:[%s381] sm:$0xff]
                %384 = vst [vmem:[%s382] sm:$0xff] %v383
                %v385 = vld [vmem:[%s381 + $0x8] sm:$0xff]
                %386 = vst [vmem:[%s382 + $0x8] sm:$0xff] %v385
                %v387 = vld [vmem:[%s381 + $0x10] sm:$0xff]
                %388 = vst [vmem:[%s382 + $0x10] sm:$0xff] %v387
                %v389 = vld [vmem:[%s381 + $0x18] sm:$0xff]
                %390 = vst [vmem:[%s382 + $0x18] sm:$0xff] %v389
                %v391 = vld [vmem:[%s381 + $0x80] sm:$0xff]
                %392 = vst [vmem:[%s382 + $0x20] sm:$0xff] %v391
                %v393 = vld [vmem:[%s381 + $0x88] sm:$0xff]
                %394 = vst [vmem:[%s382 + $0x28] sm:$0xff] %v393
                %v395 = vld [vmem:[%s381 + $0x90] sm:$0xff]
                %396 = vst [vmem:[%s382 + $0x30] sm:$0xff] %v395
                %v397 = vld [vmem:[%s381 + $0x98] sm:$0xff]
                %398 = vst [vmem:[%s382 + $0x38] sm:$0xff] %v397
                %v399 = vld [vmem:[%s381 + $0x100] sm:$0xff]
                %400 = vst [vmem:[%s382 + $0x40] sm:$0xff] %v399
                %v401 = vld [vmem:[%s381 + $0x108] sm:$0xff]
                %402 = vst [vmem:[%s382 + $0x48] sm:$0xff] %v401
                %v403 = vld [vmem:[%s381 + $0x110] sm:$0xff]
                %404 = vst [vmem:[%s382 + $0x50] sm:$0xff] %v403
                %v405 = vld [vmem:[%s381 + $0x118] sm:$0xff]
                %406 = vst [vmem:[%s382 + $0x58] sm:$0xff] %v405
                %v407 = vld [vmem:[%s381 + $0x180] sm:$0xff]
                %408 = vst [vmem:[%s382 + $0x60] sm:$0xff] %v407
                %v409 = vld [vmem:[%s381 + $0x188] sm:$0xff]
                %410 = vst [vmem:[%s382 + $0x68] sm:$0xff] %v409
                %v411 = vld [vmem:[%s381 + $0x190] sm:$0xff]
                %412 = vst [vmem:[%s382 + $0x70] sm:$0xff] %v411
                %v413 = vld [vmem:[%s381 + $0x198] sm:$0xff]
                %414 = vst [vmem:[%s382 + $0x78] sm:$0xff] %v413
              $region76: #{push_grasp_net_forward.1} parent=70 // loop_footer
                %s380 = sadd.s32 1, %s376
              $region77: #{push_grasp_net_forward.1} parent=70 // loop_footer_branch
                %375 = sbr.rel target = $region73
              $region78: #{push_grasp_net_forward.1} parent=70 // loop_exit
                _
            $region71: #{push_grasp_net_forward.1} parent=66 // pred_fallthru
              _
            // Predicated region
            $region79: #{push_grasp_net_forward.1} parent=66 // pred_check
              _
            $region80: #{push_grasp_net_forward.1} parent=66 // pred_check_branch
              %416 = sbr.rel target = $region82
            $region81: #{push_grasp_net_forward.1} parent=66 // pred_region
              _
            $region82: #{push_grasp_net_forward.1} parent=66 // pred_fallthru
              _
          $region67: #{push_grasp_net_forward.1} parent=62 // pred_fallthru
            _
          %417 = vnop
        $region63: #{push_grasp_net_forward.1} parent=35 // pred_fallthru
          _
        // Predicated region
        $region83: #{push_grasp_net_forward.1} parent=35 // pred_check
          %p418 = pneg %p91
        $region84: #{push_grasp_net_forward.1} parent=35 // pred_check_branch
          %420 = sbr.rel (%p418) target = $region86
        $region85: #{push_grasp_net_forward.1} parent=35 // pred_region
          %s421 = smul.u32 64, %s19
          %p422 = scmp.lt.s32.totalorder %s421, 255
          %s423 = scalar_select %p422, %s421, 255
          %s424 = smul.addr %s423, 4
          %s425 = scalar_lea.vmem %s2, %s424
          %s426 = smul.u32 64, %s19
        $region86: #{push_grasp_net_forward.1} parent=35 // pred_fallthru
          _
        // Predicated region
        $region87: #{push_grasp_net_forward.1} parent=35 // pred_check
          %p427 = pneg %p117
        $region88: #{push_grasp_net_forward.1} parent=35 // pred_check_branch
          %429 = sbr.rel (%p427) target = $region90
        $region89: #{push_grasp_net_forward.1} parent=35 // pred_region
          %s430 = smul.u32 64, %s19
          %p431 = scmp.lt.s32.totalorder %s430, 255
          %s432 = scalar_select %p431, %s430, 255
          %s433 = smul.addr %s432, 4
          %s434 = scalar_lea.vmem %s3, %s433
          %s435 = smul.u32 64, %s19
        $region90: #{push_grasp_net_forward.1} parent=35 // pred_fallthru
          _
      $region36: #{push_grasp_net_forward.1} parent=5 // pred_fallthru
        _
      %p436 = scmp.le.s32.totalorder 1, %s19
      %p437 = scmp.lt.s32.totalorder %s19, 5
      %p438 = pnand %p436, %p437
      %p439 = pneg %p438
      // Predicated region
      $region91: #{push_grasp_net_forward.1} parent=5 // pred_check
        _
      $region92: #{push_grasp_net_forward.1} parent=5 // pred_check_branch
        %441 = sbr.rel (%p438) target = $region94
      $region93: #{push_grasp_net_forward.1} parent=5 // pred_region
        %s442 = ssub.s32 %s19, 1
        %s443 = sand.u32 %s32, 1
        %s444 = sand.u32 %s32, 1
        %s445 = smul.addr %s444, 128
        %s446 = scalar_lea.vmem [#allocation4], %s445
        // Predicated region
        $region95: #{push_grasp_net_forward.1} parent=93 // pred_check
          %p447 = pneg %p45
        $region96: #{push_grasp_net_forward.1} parent=93 // pred_check_branch
          %449 = sbr.rel (%p447) target = $region98
        $region97: #{push_grasp_net_forward.1} parent=93 // pred_region
          _
        $region98: #{push_grasp_net_forward.1} parent=93 // pred_fallthru
          _
        %s450 = sand.u32 %s58, 1
        %s451 = sand.u32 %s58, 1
        %s452 = smul.addr %s451, 128
        %s453 = scalar_lea.vmem [#allocation5], %s452
        // Predicated region
        $region99: #{push_grasp_net_forward.1} parent=93 // pred_check
          %p454 = pneg %p71
        $region100: #{push_grasp_net_forward.1} parent=93 // pred_check_branch
          %456 = sbr.rel (%p454) target = $region102
        $region101: #{push_grasp_net_forward.1} parent=93 // pred_region
          _
        $region102: #{push_grasp_net_forward.1} parent=93 // pred_fallthru
          _
        %s457 = sand.u32 %s32, 1
        %s458 = sand.u32 %s32, 1
        %s459 = smul.addr %s458, 128
        %s460 = scalar_lea.vmem [#allocation4], %s459
        %p461 = pneg %p45
        %p462 = pneg %p42
        %s463 = sand.u32 %s58, 1
        %s464 = sand.u32 %s58, 1
        %s465 = smul.addr %s464, 128
        %s466 = scalar_lea.vmem [#allocation5], %s465
        %p467 = pneg %p71
        %p468 = pneg %p68
        %s469 = smul.u32 64, %s24
        %p470 = scmp.lt.s32.totalorder %s469, 255
        %s471 = scalar_select %p470, %s469, 255
        %s472 = smul.addr %s471, 4
        %s473 = scalar_lea.vmem %s2, %s472
        %p474 = pneg %p97
        %p475 = pneg %p94
        %s476 = smul.u32 64, %s24
        %p477 = scmp.lt.s32.totalorder %s476, 255
        %s478 = scalar_select %p477, %s476, 255
        %s479 = smul.addr %s478, 4
        %s480 = scalar_lea.vmem %s3, %s479
        %p481 = pneg %p123
        %p482 = pneg %p120
        %p483 = pneg %p144
        %p484 = pneg %p141
        %p485 = pneg %p165
        %p486 = pneg %p162
        %p487 = pneg %p186
        %p488 = pneg %p183
        %p489 = pneg %p207
        %p490 = pneg %p204
        %p491 = pneg %p228
        %p492 = pneg %p225
        %p493 = pneg %p249
        %p494 = pneg %p246
        %p495 = pneg %p270
        %p496 = pneg %p267
        %s497 = smul.u32 4, %s24
        %s498 = smul.u32 4, %s24
        %s499 = smul.u32 64, %s24
        %p500 = scmp.lt.s32.totalorder %s499, 255
        %s501 = scalar_select %p500, %s499, 255
        %s502 = smul.addr %s501, 4
        %s503 = scalar_lea.vmem %s2, %s502
        %s504 = smul.u32 64, %s24
        %s505 = smul.u32 64, %s24
        %p506 = scmp.lt.s32.totalorder %s505, 255
        %s507 = scalar_select %p506, %s505, 255
        %s508 = smul.addr %s507, 4
        %s509 = scalar_lea.vmem %s3, %s508
        %s510 = smul.u32 64, %s24
        %p512 = scmp.eq.s32.totalorder %s24, 0
        // Predicated region
        $region103: #{push_grasp_net_forward.1} parent=93 // pred_check
          %p513 = pneg %p512
        $region104: #{push_grasp_net_forward.1} parent=93 // pred_check_branch
          %515 = sbr.rel (%p513) target = $region106
        $region105: #{push_grasp_net_forward.1} parent=93 // pred_region
          %vm516 = vcmask 523264
          %517 = vst.msk [vmem:[#allocation2] sm:$0xff] %vm516, 0.0
          %518 = vst.msk [vmem:[#allocation2 + $0x8] sm:$0xff] %vm516, 0.0
          %519 = vst.msk [vmem:[#allocation2 + $0x10] sm:$0xff] %vm516, 0.0
          %520 = vst.msk [vmem:[#allocation2 + $0x18] sm:$0xff] %vm516, 0.0
          %521 = vst.msk [vmem:[#allocation3] sm:$0xff] %vm516, 0.0
          %522 = vst.msk [vmem:[#allocation3 + $0x8] sm:$0xff] %vm516, 0.0
          %523 = vst.msk [vmem:[#allocation3 + $0x10] sm:$0xff] %vm516, 0.0
          %524 = vst.msk [vmem:[#allocation3 + $0x18] sm:$0xff] %vm516, 0.0
        $region106: #{push_grasp_net_forward.1} parent=93 // pred_fallthru
          _
        %v525 = vld [vmem:[%s446] sm:$0xff]
        %v526 = vld [vmem:[%s446 + $0x8] sm:$0xff]
        %v527 = vld [vmem:[%s446 + $0x10] sm:$0xff]
        %v528 = vld [vmem:[%s446 + $0x18] sm:$0xff]
        %v529 = vld [vmem:[%s446 + $0x20] sm:$0xff]
        %v530 = vld [vmem:[%s446 + $0x28] sm:$0xff]
        %v531 = vld [vmem:[%s446 + $0x30] sm:$0xff]
        %v532 = vld [vmem:[%s446 + $0x38] sm:$0xff]
        %v533 = vld [vmem:[%s446 + $0x40] sm:$0xff]
        %v534 = vld [vmem:[%s446 + $0x48] sm:$0xff]
        %v535 = vld [vmem:[%s446 + $0x50] sm:$0xff]
        %v536 = vld [vmem:[%s446 + $0x58] sm:$0xff]
        %v537 = vld [vmem:[%s446 + $0x60] sm:$0xff]
        %v538 = vld [vmem:[%s446 + $0x68] sm:$0xff]
        %v539 = vld [vmem:[%s446 + $0x70] sm:$0xff]
        %v540 = vld [vmem:[%s446 + $0x78] sm:$0xff]
        %v541 = vadd.f32 %v525, %v529
        %v542 = vadd.f32 %v541, %v533
        %v543 = vadd.f32 %v542, %v537
        %v544 = vrot.slane %v543, 4
        %v545 = vadd.f32 %v543, %v544
        %v546 = vrot.slane %v545, 2
        %v547 = vadd.f32 %v545, %v546
        %v548 = vrot.slane %v547, 1
        %v549 = vadd.f32 %v547, %v548
        %v550 = vadd.f32 %v526, %v530
        %v551 = vadd.f32 %v550, %v534
        %v552 = vadd.f32 %v551, %v538
        %v553 = vrot.slane %v552, 4
        %v554 = vadd.f32 %v552, %v553
        %v555 = vrot.slane %v554, 2
        %v556 = vadd.f32 %v554, %v555
        %v557 = vrot.slane %v556, 1
        %v558 = vadd.f32 %v556, %v557
        %v559 = vadd.f32 %v527, %v531
        %v560 = vadd.f32 %v559, %v535
        %v561 = vadd.f32 %v560, %v539
        %v562 = vrot.slane %v561, 4
        %v563 = vadd.f32 %v561, %v562
        %v564 = vrot.slane %v563, 2
        %v565 = vadd.f32 %v563, %v564
        %v566 = vrot.slane %v565, 1
        %v567 = vadd.f32 %v565, %v566
        %v568 = vadd.f32 %v528, %v532
        %v569 = vadd.f32 %v568, %v536
        %v570 = vadd.f32 %v569, %v540
        %v571 = vrot.slane %v570, 4
        %v572 = vadd.f32 %v570, %v571
        %v573 = vrot.slane %v572, 2
        %v574 = vadd.f32 %v572, %v573
        %v575 = vrot.slane %v574, 1
        %v576 = vadd.f32 %v574, %v575
        %v577 = vmul.f32 %v549, 0.03125
        %v578 = vmul.f32 %v558, 0.03125
        %v579 = vmul.f32 %v567, 0.03125
        %v580 = vmul.f32 %v576, 0.03125
        %v581 = vmul.f32 %v525, %v525
        %v582 = vmul.f32 %v526, %v526
        %v583 = vmul.f32 %v527, %v527
        %v584 = vmul.f32 %v528, %v528
        %v585 = vmul.f32 %v529, %v529
        %v586 = vmul.f32 %v530, %v530
        %v587 = vmul.f32 %v531, %v531
        %v588 = vmul.f32 %v532, %v532
        %v589 = vmul.f32 %v533, %v533
        %v590 = vmul.f32 %v534, %v534
        %v591 = vmul.f32 %v535, %v535
        %v592 = vmul.f32 %v536, %v536
        %v593 = vmul.f32 %v537, %v537
        %v594 = vmul.f32 %v538, %v538
        %v595 = vmul.f32 %v539, %v539
        %v596 = vmul.f32 %v540, %v540
        %v597 = vadd.f32 %v581, %v585
        %v598 = vadd.f32 %v597, %v589
        %v599 = vadd.f32 %v598, %v593
        %v600 = vrot.slane %v599, 4
        %v601 = vadd.f32 %v599, %v600
        %v602 = vrot.slane %v601, 2
        %v603 = vadd.f32 %v601, %v602
        %v604 = vrot.slane %v603, 1
        %v605 = vadd.f32 %v603, %v604
        %v606 = vadd.f32 %v582, %v586
        %v607 = vadd.f32 %v606, %v590
        %v608 = vadd.f32 %v607, %v594
        %v609 = vrot.slane %v608, 4
        %v610 = vadd.f32 %v608, %v609
        %v611 = vrot.slane %v610, 2
        %v612 = vadd.f32 %v610, %v611
        %v613 = vrot.slane %v612, 1
        %v614 = vadd.f32 %v612, %v613
        %v615 = vadd.f32 %v583, %v587
        %v616 = vadd.f32 %v615, %v591
        %v617 = vadd.f32 %v616, %v595
        %v618 = vrot.slane %v617, 4
        %v619 = vadd.f32 %v617, %v618
        %v620 = vrot.slane %v619, 2
        %v621 = vadd.f32 %v619, %v620
        %v622 = vrot.slane %v621, 1
        %v623 = vadd.f32 %v621, %v622
        %v624 = vadd.f32 %v584, %v588
        %v625 = vadd.f32 %v624, %v592
        %v626 = vadd.f32 %v625, %v596
        %v627 = vrot.slane %v626, 4
        %v628 = vadd.f32 %v626, %v627
        %v629 = vrot.slane %v628, 2
        %v630 = vadd.f32 %v628, %v629
        %v631 = vrot.slane %v630, 1
        %v632 = vadd.f32 %v630, %v631
        %v633 = vmul.f32 %v605, 0.03125
        %v634 = vmul.f32 %v614, 0.03125
        %v635 = vmul.f32 %v623, 0.03125
        %v636 = vmul.f32 %v632, 0.03125
        %v637 = vmul.f32 %v577, %v577
        %v638 = vmul.f32 %v578, %v578
        %v639 = vmul.f32 %v579, %v579
        %v640 = vmul.f32 %v580, %v580
        %v641 = vsub.f32 %v633, %v637
        %v642 = vsub.f32 %v634, %v638
        %v643 = vsub.f32 %v635, %v639
        %v644 = vsub.f32 %v636, %v640
        %v645 = vmax.f32 %v641, 0.0
        %v646 = vmax.f32 %v642, 0.0
        %v647 = vmax.f32 %v643, 0.0
        %v648 = vmax.f32 %v644, 0.0
        %v649 = vsub.f32 %v525, %v577
        %v650 = vsub.f32 %v526, %v578
        %v651 = vsub.f32 %v527, %v579
        %v652 = vsub.f32 %v528, %v580
        %v653 = vsub.f32 %v529, %v577
        %v654 = vsub.f32 %v530, %v578
        %v655 = vsub.f32 %v531, %v579
        %v656 = vsub.f32 %v532, %v580
        %v657 = vsub.f32 %v533, %v577
        %v658 = vsub.f32 %v534, %v578
        %v659 = vsub.f32 %v535, %v579
        %v660 = vsub.f32 %v536, %v580
        %v661 = vsub.f32 %v537, %v577
        %v662 = vsub.f32 %v538, %v578
        %v663 = vsub.f32 %v539, %v579
        %v664 = vsub.f32 %v540, %v580
        %v665 = vadd.f32 %v645, 1e-05
        %v666 = vadd.f32 %v646, 1e-05
        %v667 = vadd.f32 %v647, 1e-05
        %v668 = vadd.f32 %v648, 1e-05
        %v669 = vrsqrt.pop %v665
        %v670 = vrsqrt.pop %v666
        %v671 = vrsqrt.pop %v667
        %v672 = vrsqrt.pop %v668
        %v673 = vmul.f32 %v649, %v669
        %v674 = vmul.f32 %v650, %v670
        %v675 = vmul.f32 %v651, %v671
        %v676 = vmul.f32 %v652, %v672
        %v677 = vmul.f32 %v653, %v669
        %v678 = vmul.f32 %v654, %v670
        %v679 = vmul.f32 %v655, %v671
        %v680 = vmul.f32 %v656, %v672
        %v681 = vmul.f32 %v657, %v669
        %v682 = vmul.f32 %v658, %v670
        %v683 = vmul.f32 %v659, %v671
        %v684 = vmul.f32 %v660, %v672
        %v685 = vmul.f32 %v661, %v669
        %v686 = vmul.f32 %v662, %v670
        %v687 = vmul.f32 %v663, %v671
        %v688 = vmul.f32 %v664, %v672
        %v689 = vmax.f32 %v673, 0.0
        %v690 = vmax.f32 %v674, 0.0
        %v691 = vmax.f32 %v675, 0.0
        %v692 = vmax.f32 %v676, 0.0
        %v693 = vmax.f32 %v677, 0.0
        %v694 = vmax.f32 %v678, 0.0
        %v695 = vmax.f32 %v679, 0.0
        %v696 = vmax.f32 %v680, 0.0
        %v697 = vmax.f32 %v681, 0.0
        %v698 = vmax.f32 %v682, 0.0
        %v699 = vmax.f32 %v683, 0.0
        %v700 = vmax.f32 %v684, 0.0
        %v701 = vmax.f32 %v685, 0.0
        %v702 = vmax.f32 %v686, 0.0
        %v703 = vmax.f32 %v687, 0.0
        %v704 = vmax.f32 %v688, 0.0
        %v705 = vld [vmem:[#allocation2] sm:$0xff]
        %v706 = vld [vmem:[#allocation2 + $0x8] sm:$0xff]
        %v707 = vld [vmem:[#allocation2 + $0x10] sm:$0xff]
        %v708 = vld [vmem:[#allocation2 + $0x18] sm:$0xff]
        %v709 = vpack.c.bf16 %v693, %v689
        %v710 = vpack.c.bf16 %v694, %v690
        %v711 = vpack.c.bf16 %v695, %v691
        %v712 = vpack.c.bf16 %v696, %v692
        %v713 = vpack.c.bf16 %v701, %v697
        %v714 = vpack.c.bf16 %v702, %v698
        %v715 = vpack.c.bf16 %v703, %v699
        %v716 = vpack.c.bf16 %v704, %v700
        %v717 = vld [vmem:[%s503] sm:$0xf]
        %v718 = vld [vmem:[%s503 + $0x4] sm:$0xf]
        %v719 = vld [vmem:[%s503 + $0x8] sm:$0xf]
        %v720 = vld [vmem:[%s503 + $0xc] sm:$0xf]
        %v721 = vld [vmem:[%s503 + $0x10] sm:$0xf]
        %v722 = vld [vmem:[%s503 + $0x14] sm:$0xf]
        %v723 = vld [vmem:[%s503 + $0x18] sm:$0xf]
        %v724 = vld [vmem:[%s503 + $0x1c] sm:$0xf]
        %v725 = vld [vmem:[%s503 + $0x20] sm:$0xf]
        %v726 = vld [vmem:[%s503 + $0x24] sm:$0xf]
        %v727 = vld [vmem:[%s503 + $0x28] sm:$0xf]
        %v728 = vld [vmem:[%s503 + $0x2c] sm:$0xf]
        %v729 = vld [vmem:[%s503 + $0x30] sm:$0xf]
        %v730 = vld [vmem:[%s503 + $0x34] sm:$0xf]
        %v731 = vld [vmem:[%s503 + $0x38] sm:$0xf]
        %v732 = vld [vmem:[%s503 + $0x3c] sm:$0xf]
        %v733 = vld [vmem:[%s503 + $0x40] sm:$0xf]
        %v734 = vld [vmem:[%s503 + $0x44] sm:$0xf]
        %v735 = vld [vmem:[%s503 + $0x48] sm:$0xf]
        %v736 = vld [vmem:[%s503 + $0x4c] sm:$0xf]
        %v737 = vld [vmem:[%s503 + $0x50] sm:$0xf]
        %v738 = vld [vmem:[%s503 + $0x54] sm:$0xf]
        %v739 = vld [vmem:[%s503 + $0x58] sm:$0xf]
        %v740 = vld [vmem:[%s503 + $0x5c] sm:$0xf]
        %v741 = vld [vmem:[%s503 + $0x60] sm:$0xf]
        %v742 = vld [vmem:[%s503 + $0x64] sm:$0xf]
        %v743 = vld [vmem:[%s503 + $0x68] sm:$0xf]
        %v744 = vld [vmem:[%s503 + $0x6c] sm:$0xf]
        %v745 = vld [vmem:[%s503 + $0x70] sm:$0xf]
        %v746 = vld [vmem:[%s503 + $0x74] sm:$0xf]
        %v747 = vld [vmem:[%s503 + $0x78] sm:$0xf]
        %v748 = vld [vmem:[%s503 + $0x7c] sm:$0xf]
        %v749 = vld [vmem:[%s503 + $0x80] sm:$0xf]
        %v750 = vld [vmem:[%s503 + $0x84] sm:$0xf]
        %v751 = vld [vmem:[%s503 + $0x88] sm:$0xf]
        %v752 = vld [vmem:[%s503 + $0x8c] sm:$0xf]
        %v753 = vld [vmem:[%s503 + $0x90] sm:$0xf]
        %v754 = vld [vmem:[%s503 + $0x94] sm:$0xf]
        %v755 = vld [vmem:[%s503 + $0x98] sm:$0xf]
        %v756 = vld [vmem:[%s503 + $0x9c] sm:$0xf]
        %v757 = vld [vmem:[%s503 + $0xa0] sm:$0xf]
        %v758 = vld [vmem:[%s503 + $0xa4] sm:$0xf]
        %v759 = vld [vmem:[%s503 + $0xa8] sm:$0xf]
        %v760 = vld [vmem:[%s503 + $0xac] sm:$0xf]
        %v761 = vld [vmem:[%s503 + $0xb0] sm:$0xf]
        %v762 = vld [vmem:[%s503 + $0xb4] sm:$0xf]
        %v763 = vld [vmem:[%s503 + $0xb8] sm:$0xf]
        %v764 = vld [vmem:[%s503 + $0xbc] sm:$0xf]
        %v765 = vld [vmem:[%s503 + $0xc0] sm:$0xf]
        %v766 = vld [vmem:[%s503 + $0xc4] sm:$0xf]
        %v767 = vld [vmem:[%s503 + $0xc8] sm:$0xf]
        %v768 = vld [vmem:[%s503 + $0xcc] sm:$0xf]
        %v769 = vld [vmem:[%s503 + $0xd0] sm:$0xf]
        %v770 = vld [vmem:[%s503 + $0xd4] sm:$0xf]
        %v771 = vld [vmem:[%s503 + $0xd8] sm:$0xf]
        %v772 = vld [vmem:[%s503 + $0xdc] sm:$0xf]
        %v773 = vld [vmem:[%s503 + $0xe0] sm:$0xf]
        %v774 = vld [vmem:[%s503 + $0xe4] sm:$0xf]
        %v775 = vld [vmem:[%s503 + $0xe8] sm:$0xf]
        %v776 = vld [vmem:[%s503 + $0xec] sm:$0xf]
        %v777 = vld [vmem:[%s503 + $0xf0] sm:$0xf]
        %v778 = vld [vmem:[%s503 + $0xf4] sm:$0xf]
        %v779 = vld [vmem:[%s503 + $0xf8] sm:$0xf]
        %v780 = vld [vmem:[%s503 + $0xfc] sm:$0xf]
        %v845 = vunpack.c.l.b16 %v717
        %v846 = vunpack.c.l.b16 %v718
        %v847 = vunpack.c.l.b16 %v719
        %v848 = vunpack.c.l.b16 %v720
        %v849 = vunpack.c.l.b16 %v721
        %v850 = vunpack.c.l.b16 %v722
        %v851 = vunpack.c.l.b16 %v723
        %v852 = vunpack.c.l.b16 %v724
        %v853 = vunpack.c.l.b16 %v725
        %v854 = vunpack.c.l.b16 %v726
        %v855 = vunpack.c.l.b16 %v727
        %v856 = vunpack.c.l.b16 %v728
        %v857 = vunpack.c.l.b16 %v729
        %v858 = vunpack.c.l.b16 %v730
        %v859 = vunpack.c.l.b16 %v731
        %v860 = vunpack.c.l.b16 %v732
        %v861 = vunpack.c.l.b16 %v733
        %v862 = vunpack.c.l.b16 %v734
        %v863 = vunpack.c.l.b16 %v735
        %v864 = vunpack.c.l.b16 %v736
        %v865 = vunpack.c.l.b16 %v737
        %v866 = vunpack.c.l.b16 %v738
        %v867 = vunpack.c.l.b16 %v739
        %v868 = vunpack.c.l.b16 %v740
        %v869 = vunpack.c.l.b16 %v741
        %v870 = vunpack.c.l.b16 %v742
        %v871 = vunpack.c.l.b16 %v743
        %v872 = vunpack.c.l.b16 %v744
        %v873 = vunpack.c.l.b16 %v745
        %v874 = vunpack.c.l.b16 %v746
        %v875 = vunpack.c.l.b16 %v747
        %v876 = vunpack.c.l.b16 %v748
        %v877 = vunpack.c.l.b16 %v749
        %v878 = vunpack.c.l.b16 %v750
        %v879 = vunpack.c.l.b16 %v751
        %v880 = vunpack.c.l.b16 %v752
        %v881 = vunpack.c.l.b16 %v753
        %v882 = vunpack.c.l.b16 %v754
        %v883 = vunpack.c.l.b16 %v755
        %v884 = vunpack.c.l.b16 %v756
        %v885 = vunpack.c.l.b16 %v757
        %v886 = vunpack.c.l.b16 %v758
        %v887 = vunpack.c.l.b16 %v759
        %v888 = vunpack.c.l.b16 %v760
        %v889 = vunpack.c.l.b16 %v761
        %v890 = vunpack.c.l.b16 %v762
        %v891 = vunpack.c.l.b16 %v763
        %v892 = vunpack.c.l.b16 %v764
        %v893 = vunpack.c.l.b16 %v765
        %v894 = vunpack.c.l.b16 %v766
        %v895 = vunpack.c.l.b16 %v767
        %v896 = vunpack.c.l.b16 %v768
        %v897 = vunpack.c.l.b16 %v769
        %v898 = vunpack.c.l.b16 %v770
        %v899 = vunpack.c.l.b16 %v771
        %v900 = vunpack.c.l.b16 %v772
        %v901 = vunpack.c.l.b16 %v773
        %v902 = vunpack.c.l.b16 %v774
        %v903 = vunpack.c.l.b16 %v775
        %v904 = vunpack.c.l.b16 %v776
        %v905 = vunpack.c.l.b16 %v777
        %v906 = vunpack.c.l.b16 %v778
        %v907 = vunpack.c.l.b16 %v779
        %v908 = vunpack.c.l.b16 %v780
        %v909 = vpack.c.b16 %v846, %v845
        %v910 = vpack.c.b16 %v848, %v847
        %v911 = vpack.c.b16 %v850, %v849
        %v912 = vpack.c.b16 %v852, %v851
        %v913 = vpack.c.b16 %v854, %v853
        %v914 = vpack.c.b16 %v856, %v855
        %v915 = vpack.c.b16 %v858, %v857
        %v916 = vpack.c.b16 %v860, %v859
        %v917 = vpack.c.b16 %v862, %v861
        %v918 = vpack.c.b16 %v864, %v863
        %v919 = vpack.c.b16 %v866, %v865
        %v920 = vpack.c.b16 %v868, %v867
        %v921 = vpack.c.b16 %v870, %v869
        %v922 = vpack.c.b16 %v872, %v871
        %v923 = vpack.c.b16 %v874, %v873
        %v924 = vpack.c.b16 %v876, %v875
        %v925 = vpack.c.b16 %v878, %v877
        %v926 = vpack.c.b16 %v880, %v879
        %v927 = vpack.c.b16 %v882, %v881
        %v928 = vpack.c.b16 %v884, %v883
        %v929 = vpack.c.b16 %v886, %v885
        %v930 = vpack.c.b16 %v888, %v887
        %v931 = vpack.c.b16 %v890, %v889
        %v932 = vpack.c.b16 %v892, %v891
        %v933 = vpack.c.b16 %v894, %v893
        %v934 = vpack.c.b16 %v896, %v895
        %v935 = vpack.c.b16 %v898, %v897
        %v936 = vpack.c.b16 %v900, %v899
        %v937 = vpack.c.b16 %v902, %v901
        %v938 = vpack.c.b16 %v904, %v903
        %v939 = vpack.c.b16 %v906, %v905
        %v940 = vpack.c.b16 %v908, %v907
        %973 = vmatprep.subr.bf16.mxu0 0
        %974 = vmatpush1.bf16.msra.mxu0 %v909
        %975 = vmatprep.subr.bf16.mxu0 0
        %976 = vmatpush1.bf16.msra.mxu0 %v910
        %977 = vmatprep.subr.bf16.mxu0 0
        %978 = vmatpush1.bf16.msra.mxu0 %v911
        %979 = vmatprep.subr.bf16.mxu0 0
        %980 = vmatpush1.bf16.msra.mxu0 %v912
        %981 = vmatprep.subr.bf16.mxu0 0
        %982 = vmatpush1.bf16.msra.mxu0 %v913
        %983 = vmatprep.subr.bf16.mxu0 0
        %984 = vmatpush1.bf16.msra.mxu0 %v914
        %985 = vmatprep.subr.bf16.mxu0 0
        %986 = vmatpush1.bf16.msra.mxu0 %v915
        %987 = vmatprep.subr.bf16.mxu0 0
        %988 = vmatpush1.bf16.msra.mxu0 %v916
        %989 = vmatprep.subr.bf16.mxu0 0
        %990 = vmatpush1.bf16.msra.mxu0 %v917
        %991 = vmatprep.subr.bf16.mxu0 0
        %992 = vmatpush1.bf16.msra.mxu0 %v918
        %993 = vmatprep.subr.bf16.mxu0 0
        %994 = vmatpush1.bf16.msra.mxu0 %v919
        %995 = vmatprep.subr.bf16.mxu0 0
        %996 = vmatpush1.bf16.msra.mxu0 %v920
        %997 = vmatprep.subr.bf16.mxu0 0
        %998 = vmatpush1.bf16.msra.mxu0 %v921
        %999 = vmatprep.subr.bf16.mxu0 0
        %1000 = vmatpush1.bf16.msra.mxu0 %v922
        %1001 = vmatprep.subr.bf16.mxu0 0
        %1002 = vmatpush1.bf16.msra.mxu0 %v923
        %1003 = vmatprep.subr.bf16.mxu0 0
        %1004 = vmatpush1.bf16.msra.mxu0 %v924
        %1005 = vmatprep.mubr.bf16.mxu0 %v710
        %1006 = vmatmul.mubr.bf16.gmra.mrb[0].mxu0 %v709
        %v1007 = vpop.f32.mrb[0].mxu0
        %v1008 = vadd.f32 0.0, %v1007
        %v1009 = vpop.f32.mrb[0].mxu0
        %v1010 = vpop.f32.mrb[0].mxu0
        %v1011 = vadd.f32 0.0, %v1010
        %v1012 = vpop.f32.mrb[0].mxu0
        %1013 = vmatprep.mubr.bf16.mxu0 %v714
        %1014 = vmatmul.mubr.bf16.gmra.mrb[0].mxu0 %v713
        %v1015 = vpop.f32.mrb[0].mxu0
        %v1016 = vadd.f32 0.0, %v1015
        %v1017 = vpop.f32.mrb[0].mxu0
        %v1018 = vpop.f32.mrb[0].mxu0
        %v1019 = vadd.f32 0.0, %v1018
        %v1020 = vpop.f32.mrb[0].mxu0
        %1021 = vdwg.mxu0
        %1022 = vmatprep.subr.bf16.mxu0 0
        %1023 = vmatpush1.bf16.msra.mxu0 %v925
        %1024 = vmatprep.subr.bf16.mxu0 0
        %1025 = vmatpush1.bf16.msra.mxu0 %v926
        %1026 = vmatprep.subr.bf16.mxu0 0
        %1027 = vmatpush1.bf16.msra.mxu0 %v927
        %1028 = vmatprep.subr.bf16.mxu0 0
        %1029 = vmatpush1.bf16.msra.mxu0 %v928
        %1030 = vmatprep.subr.bf16.mxu0 0
        %1031 = vmatpush1.bf16.msra.mxu0 %v929
        %1032 = vmatprep.subr.bf16.mxu0 0
        %1033 = vmatpush1.bf16.msra.mxu0 %v930
        %1034 = vmatprep.subr.bf16.mxu0 0
        %1035 = vmatpush1.bf16.msra.mxu0 %v931
        %1036 = vmatprep.subr.bf16.mxu0 0
        %1037 = vmatpush1.bf16.msra.mxu0 %v932
        %1038 = vmatprep.subr.bf16.mxu0 0
        %1039 = vmatpush1.bf16.msra.mxu0 %v933
        %1040 = vmatprep.subr.bf16.mxu0 0
        %1041 = vmatpush1.bf16.msra.mxu0 %v934
        %1042 = vmatprep.subr.bf16.mxu0 0
        %1043 = vmatpush1.bf16.msra.mxu0 %v935
        %1044 = vmatprep.subr.bf16.mxu0 0
        %1045 = vmatpush1.bf16.msra.mxu0 %v936
        %1046 = vmatprep.subr.bf16.mxu0 0
        %1047 = vmatpush1.bf16.msra.mxu0 %v937
        %1048 = vmatprep.subr.bf16.mxu0 0
        %1049 = vmatpush1.bf16.msra.mxu0 %v938
        %1050 = vmatprep.subr.bf16.mxu0 0
        %1051 = vmatpush1.bf16.msra.mxu0 %v939
        %1052 = vmatprep.subr.bf16.mxu0 0
        %1053 = vmatpush1.bf16.msra.mxu0 %v940
        %1054 = vmatprep.mubr.bf16.mxu0 %v712
        %1055 = vmatmul.mubr.bf16.gmra.mrb[0].mxu0 %v711
        %v1056 = vpop.f32.mrb[0].mxu0
        %v1057 = vadd.f32 %v1008, %v1056
        %v1058 = vpop.f32.mrb[0].mxu0
        %v1059 = vpop.f32.mrb[0].mxu0
        %v1060 = vadd.f32 %v1011, %v1059
        %v1061 = vpop.f32.mrb[0].mxu0
        %1062 = vmatprep.mubr.bf16.mxu0 %v716
        %1063 = vmatmul.mubr.bf16.gmra.mrb[0].mxu0 %v715
        %v1064 = vpop.f32.mrb[0].mxu0
        %v1065 = vadd.f32 %v1016, %v1064
        %v1066 = vpop.f32.mrb[0].mxu0
        %v1067 = vpop.f32.mrb[0].mxu0
        %v1068 = vadd.f32 %v1019, %v1067
        %v1069 = vpop.f32.mrb[0].mxu0
        %1070 = vdwg.mxu0
        %v1071 = vadd.f32 %v705, %v1057
        %v1072 = vadd.f32 %v706, %v1060
        %v1073 = vadd.f32 %v707, %v1065
        %v1074 = vadd.f32 %v708, %v1068
        %vm1075 = vcmask 523264
        %1076 = vst.msk [vmem:[#allocation2] sm:$0xff] %vm1075, %v1071
        %1077 = vst.msk [vmem:[#allocation2 + $0x8] sm:$0xff] %vm1075, %v1072
        %1078 = vst.msk [vmem:[#allocation2 + $0x10] sm:$0xff] %vm1075, %v1073
        %1079 = vst.msk [vmem:[#allocation2 + $0x18] sm:$0xff] %vm1075, %v1074
        %v1080 = vld [vmem:[%s453] sm:$0xff]
        %v1081 = vld [vmem:[%s453 + $0x8] sm:$0xff]
        %v1082 = vld [vmem:[%s453 + $0x10] sm:$0xff]
        %v1083 = vld [vmem:[%s453 + $0x18] sm:$0xff]
        %v1084 = vld [vmem:[%s453 + $0x20] sm:$0xff]
        %v1085 = vld [vmem:[%s453 + $0x28] sm:$0xff]
        %v1086 = vld [vmem:[%s453 + $0x30] sm:$0xff]
        %v1087 = vld [vmem:[%s453 + $0x38] sm:$0xff]
        %v1088 = vld [vmem:[%s453 + $0x40] sm:$0xff]
        %v1089 = vld [vmem:[%s453 + $0x48] sm:$0xff]
        %v1090 = vld [vmem:[%s453 + $0x50] sm:$0xff]
        %v1091 = vld [vmem:[%s453 + $0x58] sm:$0xff]
        %v1092 = vld [vmem:[%s453 + $0x60] sm:$0xff]
        %v1093 = vld [vmem:[%s453 + $0x68] sm:$0xff]
        %v1094 = vld [vmem:[%s453 + $0x70] sm:$0xff]
        %v1095 = vld [vmem:[%s453 + $0x78] sm:$0xff]
        %v1096 = vadd.f32 %v1080, %v1084
        %v1097 = vadd.f32 %v1096, %v1088
        %v1098 = vadd.f32 %v1097, %v1092
        %v1099 = vrot.slane %v1098, 4
        %v1100 = vadd.f32 %v1098, %v1099
        %v1101 = vrot.slane %v1100, 2
        %v1102 = vadd.f32 %v1100, %v1101
        %v1103 = vrot.slane %v1102, 1
        %v1104 = vadd.f32 %v1102, %v1103
        %v1105 = vadd.f32 %v1081, %v1085
        %v1106 = vadd.f32 %v1105, %v1089
        %v1107 = vadd.f32 %v1106, %v1093
        %v1108 = vrot.slane %v1107, 4
        %v1109 = vadd.f32 %v1107, %v1108
        %v1110 = vrot.slane %v1109, 2
        %v1111 = vadd.f32 %v1109, %v1110
        %v1112 = vrot.slane %v1111, 1
        %v1113 = vadd.f32 %v1111, %v1112
        %v1114 = vadd.f32 %v1082, %v1086
        %v1115 = vadd.f32 %v1114, %v1090
        %v1116 = vadd.f32 %v1115, %v1094
        %v1117 = vrot.slane %v1116, 4
        %v1118 = vadd.f32 %v1116, %v1117
        %v1119 = vrot.slane %v1118, 2
        %v1120 = vadd.f32 %v1118, %v1119
        %v1121 = vrot.slane %v1120, 1
        %v1122 = vadd.f32 %v1120, %v1121
        %v1123 = vadd.f32 %v1083, %v1087
        %v1124 = vadd.f32 %v1123, %v1091
        %v1125 = vadd.f32 %v1124, %v1095
        %v1126 = vrot.slane %v1125, 4
        %v1127 = vadd.f32 %v1125, %v1126
        %v1128 = vrot.slane %v1127, 2
        %v1129 = vadd.f32 %v1127, %v1128
        %v1130 = vrot.slane %v1129, 1
        %v1131 = vadd.f32 %v1129, %v1130
        %v1132 = vmul.f32 %v1104, 0.03125
        %v1133 = vmul.f32 %v1113, 0.03125
        %v1134 = vmul.f32 %v1122, 0.03125
        %v1135 = vmul.f32 %v1131, 0.03125
        %v1136 = vmul.f32 %v1080, %v1080
        %v1137 = vmul.f32 %v1081, %v1081
        %v1138 = vmul.f32 %v1082, %v1082
        %v1139 = vmul.f32 %v1083, %v1083
        %v1140 = vmul.f32 %v1084, %v1084
        %v1141 = vmul.f32 %v1085, %v1085
        %v1142 = vmul.f32 %v1086, %v1086
        %v1143 = vmul.f32 %v1087, %v1087
        %v1144 = vmul.f32 %v1088, %v1088
        %v1145 = vmul.f32 %v1089, %v1089
        %v1146 = vmul.f32 %v1090, %v1090
        %v1147 = vmul.f32 %v1091, %v1091
        %v1148 = vmul.f32 %v1092, %v1092
        %v1149 = vmul.f32 %v1093, %v1093
        %v1150 = vmul.f32 %v1094, %v1094
        %v1151 = vmul.f32 %v1095, %v1095
        %v1152 = vadd.f32 %v1136, %v1140
        %v1153 = vadd.f32 %v1152, %v1144
        %v1154 = vadd.f32 %v1153, %v1148
        %v1155 = vrot.slane %v1154, 4
        %v1156 = vadd.f32 %v1154, %v1155
        %v1157 = vrot.slane %v1156, 2
        %v1158 = vadd.f32 %v1156, %v1157
        %v1159 = vrot.slane %v1158, 1
        %v1160 = vadd.f32 %v1158, %v1159
        %v1161 = vadd.f32 %v1137, %v1141
        %v1162 = vadd.f32 %v1161, %v1145
        %v1163 = vadd.f32 %v1162, %v1149
        %v1164 = vrot.slane %v1163, 4
        %v1165 = vadd.f32 %v1163, %v1164
        %v1166 = vrot.slane %v1165, 2
        %v1167 = vadd.f32 %v1165, %v1166
        %v1168 = vrot.slane %v1167, 1
        %v1169 = vadd.f32 %v1167, %v1168
        %v1170 = vadd.f32 %v1138, %v1142
        %v1171 = vadd.f32 %v1170, %v1146
        %v1172 = vadd.f32 %v1171, %v1150
        %v1173 = vrot.slane %v1172, 4
        %v1174 = vadd.f32 %v1172, %v1173
        %v1175 = vrot.slane %v1174, 2
        %v1176 = vadd.f32 %v1174, %v1175
        %v1177 = vrot.slane %v1176, 1
        %v1178 = vadd.f32 %v1176, %v1177
        %v1179 = vadd.f32 %v1139, %v1143
        %v1180 = vadd.f32 %v1179, %v1147
        %v1181 = vadd.f32 %v1180, %v1151
        %v1182 = vrot.slane %v1181, 4
        %v1183 = vadd.f32 %v1181, %v1182
        %v1184 = vrot.slane %v1183, 2
        %v1185 = vadd.f32 %v1183, %v1184
        %v1186 = vrot.slane %v1185, 1
        %v1187 = vadd.f32 %v1185, %v1186
        %v1188 = vmul.f32 %v1160, 0.03125
        %v1189 = vmul.f32 %v1169, 0.03125
        %v1190 = vmul.f32 %v1178, 0.03125
        %v1191 = vmul.f32 %v1187, 0.03125
        %v1192 = vmul.f32 %v1132, %v1132
        %v1193 = vmul.f32 %v1133, %v1133
        %v1194 = vmul.f32 %v1134, %v1134
        %v1195 = vmul.f32 %v1135, %v1135
        %v1196 = vsub.f32 %v1188, %v1192
        %v1197 = vsub.f32 %v1189, %v1193
        %v1198 = vsub.f32 %v1190, %v1194
        %v1199 = vsub.f32 %v1191, %v1195
        %v1200 = vmax.f32 %v1196, 0.0
        %v1201 = vmax.f32 %v1197, 0.0
        %v1202 = vmax.f32 %v1198, 0.0
        %v1203 = vmax.f32 %v1199, 0.0
        %v1204 = vsub.f32 %v1080, %v1132
        %v1205 = vsub.f32 %v1081, %v1133
        %v1206 = vsub.f32 %v1082, %v1134
        %v1207 = vsub.f32 %v1083, %v1135
        %v1208 = vsub.f32 %v1084, %v1132
        %v1209 = vsub.f32 %v1085, %v1133
        %v1210 = vsub.f32 %v1086, %v1134
        %v1211 = vsub.f32 %v1087, %v1135
        %v1212 = vsub.f32 %v1088, %v1132
        %v1213 = vsub.f32 %v1089, %v1133
        %v1214 = vsub.f32 %v1090, %v1134
        %v1215 = vsub.f32 %v1091, %v1135
        %v1216 = vsub.f32 %v1092, %v1132
        %v1217 = vsub.f32 %v1093, %v1133
        %v1218 = vsub.f32 %v1094, %v1134
        %v1219 = vsub.f32 %v1095, %v1135
        %v1220 = vadd.f32 %v1200, 1e-05
        %v1221 = vadd.f32 %v1201, 1e-05
        %v1222 = vadd.f32 %v1202, 1e-05
        %v1223 = vadd.f32 %v1203, 1e-05
        %v1224 = vrsqrt.pop %v1220
        %v1225 = vrsqrt.pop %v1221
        %v1226 = vrsqrt.pop %v1222
        %v1227 = vrsqrt.pop %v1223
        %v1228 = vmul.f32 %v1204, %v1224
        %v1229 = vmul.f32 %v1205, %v1225
        %v1230 = vmul.f32 %v1206, %v1226
        %v1231 = vmul.f32 %v1207, %v1227
        %v1232 = vmul.f32 %v1208, %v1224
        %v1233 = vmul.f32 %v1209, %v1225
        %v1234 = vmul.f32 %v1210, %v1226
        %v1235 = vmul.f32 %v1211, %v1227
        %v1236 = vmul.f32 %v1212, %v1224
        %v1237 = vmul.f32 %v1213, %v1225
        %v1238 = vmul.f32 %v1214, %v1226
        %v1239 = vmul.f32 %v1215, %v1227
        %v1240 = vmul.f32 %v1216, %v1224
        %v1241 = vmul.f32 %v1217, %v1225
        %v1242 = vmul.f32 %v1218, %v1226
        %v1243 = vmul.f32 %v1219, %v1227
        %v1244 = vmax.f32 %v1228, 0.0
        %v1245 = vmax.f32 %v1229, 0.0
        %v1246 = vmax.f32 %v1230, 0.0
        %v1247 = vmax.f32 %v1231, 0.0
        %v1248 = vmax.f32 %v1232, 0.0
        %v1249 = vmax.f32 %v1233, 0.0
        %v1250 = vmax.f32 %v1234, 0.0
        %v1251 = vmax.f32 %v1235, 0.0
        %v1252 = vmax.f32 %v1236, 0.0
        %v1253 = vmax.f32 %v1237, 0.0
        %v1254 = vmax.f32 %v1238, 0.0
        %v1255 = vmax.f32 %v1239, 0.0
        %v1256 = vmax.f32 %v1240, 0.0
        %v1257 = vmax.f32 %v1241, 0.0
        %v1258 = vmax.f32 %v1242, 0.0
        %v1259 = vmax.f32 %v1243, 0.0
        %v1260 = vld [vmem:[#allocation3] sm:$0xff]
        %v1261 = vld [vmem:[#allocation3 + $0x8] sm:$0xff]
        %v1262 = vld [vmem:[#allocation3 + $0x10] sm:$0xff]
        %v1263 = vld [vmem:[#allocation3 + $0x18] sm:$0xff]
        %v1264 = vpack.c.bf16 %v1248, %v1244
        %v1265 = vpack.c.bf16 %v1249, %v1245
        %v1266 = vpack.c.bf16 %v1250, %v1246
        %v1267 = vpack.c.bf16 %v1251, %v1247
        %v1268 = vpack.c.bf16 %v1256, %v1252
        %v1269 = vpack.c.bf16 %v1257, %v1253
        %v1270 = vpack.c.bf16 %v1258, %v1254
        %v1271 = vpack.c.bf16 %v1259, %v1255
        %v1272 = vld [vmem:[%s509] sm:$0xf]
        %v1273 = vld [vmem:[%s509 + $0x4] sm:$0xf]
        %v1274 = vld [vmem:[%s509 + $0x8] sm:$0xf]
        %v1275 = vld [vmem:[%s509 + $0xc] sm:$0xf]
        %v1276 = vld [vmem:[%s509 + $0x10] sm:$0xf]
        %v1277 = vld [vmem:[%s509 + $0x14] sm:$0xf]
        %v1278 = vld [vmem:[%s509 + $0x18] sm:$0xf]
        %v1279 = vld [vmem:[%s509 + $0x1c] sm:$0xf]
        %v1280 = vld [vmem:[%s509 + $0x20] sm:$0xf]
        %v1281 = vld [vmem:[%s509 + $0x24] sm:$0xf]
        %v1282 = vld [vmem:[%s509 + $0x28] sm:$0xf]
        %v1283 = vld [vmem:[%s509 + $0x2c] sm:$0xf]
        %v1284 = vld [vmem:[%s509 + $0x30] sm:$0xf]
        %v1285 = vld [vmem:[%s509 + $0x34] sm:$0xf]
        %v1286 = vld [vmem:[%s509 + $0x38] sm:$0xf]
        %v1287 = vld [vmem:[%s509 + $0x3c] sm:$0xf]
        %v1288 = vld [vmem:[%s509 + $0x40] sm:$0xf]
        %v1289 = vld [vmem:[%s509 + $0x44] sm:$0xf]
        %v1290 = vld [vmem:[%s509 + $0x48] sm:$0xf]
        %v1291 = vld [vmem:[%s509 + $0x4c] sm:$0xf]
        %v1292 = vld [vmem:[%s509 + $0x50] sm:$0xf]
        %v1293 = vld [vmem:[%s509 + $0x54] sm:$0xf]
        %v1294 = vld [vmem:[%s509 + $0x58] sm:$0xf]
        %v1295 = vld [vmem:[%s509 + $0x5c] sm:$0xf]
        %v1296 = vld [vmem:[%s509 + $0x60] sm:$0xf]
        %v1297 = vld [vmem:[%s509 + $0x64] sm:$0xf]
        %v1298 = vld [vmem:[%s509 + $0x68] sm:$0xf]
        %v1299 = vld [vmem:[%s509 + $0x6c] sm:$0xf]
        %v1300 = vld [vmem:[%s509 + $0x70] sm:$0xf]
        %v1301 = vld [vmem:[%s509 + $0x74] sm:$0xf]
        %v1302 = vld [vmem:[%s509 + $0x78] sm:$0xf]
        %v1303 = vld [vmem:[%s509 + $0x7c] sm:$0xf]
        %v1304 = vld [vmem:[%s509 + $0x80] sm:$0xf]
        %v1305 = vld [vmem:[%s509 + $0x84] sm:$0xf]
        %v1306 = vld [vmem:[%s509 + $0x88] sm:$0xf]
        %v1307 = vld [vmem:[%s509 + $0x8c] sm:$0xf]
        %v1308 = vld [vmem:[%s509 + $0x90] sm:$0xf]
        %v1309 = vld [vmem:[%s509 + $0x94] sm:$0xf]
        %v1310 = vld [vmem:[%s509 + $0x98] sm:$0xf]
        %v1311 = vld [vmem:[%s509 + $0x9c] sm:$0xf]
        %v1312 = vld [vmem:[%s509 + $0xa0] sm:$0xf]
        %v1313 = vld [vmem:[%s509 + $0xa4] sm:$0xf]
        %v1314 = vld [vmem:[%s509 + $0xa8] sm:$0xf]
        %v1315 = vld [vmem:[%s509 + $0xac] sm:$0xf]
        %v1316 = vld [vmem:[%s509 + $0xb0] sm:$0xf]
        %v1317 = vld [vmem:[%s509 + $0xb4] sm:$0xf]
        %v1318 = vld [vmem:[%s509 + $0xb8] sm:$0xf]
        %v1319 = vld [vmem:[%s509 + $0xbc] sm:$0xf]
        %v1320 = vld [vmem:[%s509 + $0xc0] sm:$0xf]
        %v1321 = vld [vmem:[%s509 + $0xc4] sm:$0xf]
        %v1322 = vld [vmem:[%s509 + $0xc8] sm:$0xf]
        %v1323 = vld [vmem:[%s509 + $0xcc] sm:$0xf]
        %v1324 = vld [vmem:[%s509 + $0xd0] sm:$0xf]
        %v1325 = vld [vmem:[%s509 + $0xd4] sm:$0xf]
        %v1326 = vld [vmem:[%s509 + $0xd8] sm:$0xf]
        %v1327 = vld [vmem:[%s509 + $0xdc] sm:$0xf]
        %v1328 = vld [vmem:[%s509 + $0xe0] sm:$0xf]
        %v1329 = vld [vmem:[%s509 + $0xe4] sm:$0xf]
        %v1330 = vld [vmem:[%s509 + $0xe8] sm:$0xf]
        %v1331 = vld [vmem:[%s509 + $0xec] sm:$0xf]
        %v1332 = vld [vmem:[%s509 + $0xf0] sm:$0xf]
        %v1333 = vld [vmem:[%s509 + $0xf4] sm:$0xf]
        %v1334 = vld [vmem:[%s509 + $0xf8] sm:$0xf]
        %v1335 = vld [vmem:[%s509 + $0xfc] sm:$0xf]
        %v1400 = vunpack.c.l.b16 %v1272
        %v1401 = vunpack.c.l.b16 %v1273
        %v1402 = vunpack.c.l.b16 %v1274
        %v1403 = vunpack.c.l.b16 %v1275
        %v1404 = vunpack.c.l.b16 %v1276
        %v1405 = vunpack.c.l.b16 %v1277
        %v1406 = vunpack.c.l.b16 %v1278
        %v1407 = vunpack.c.l.b16 %v1279
        %v1408 = vunpack.c.l.b16 %v1280
        %v1409 = vunpack.c.l.b16 %v1281
        %v1410 = vunpack.c.l.b16 %v1282
        %v1411 = vunpack.c.l.b16 %v1283
        %v1412 = vunpack.c.l.b16 %v1284
        %v1413 = vunpack.c.l.b16 %v1285
        %v1414 = vunpack.c.l.b16 %v1286
        %v1415 = vunpack.c.l.b16 %v1287
        %v1416 = vunpack.c.l.b16 %v1288
        %v1417 = vunpack.c.l.b16 %v1289
        %v1418 = vunpack.c.l.b16 %v1290
        %v1419 = vunpack.c.l.b16 %v1291
        %v1420 = vunpack.c.l.b16 %v1292
        %v1421 = vunpack.c.l.b16 %v1293
        %v1422 = vunpack.c.l.b16 %v1294
        %v1423 = vunpack.c.l.b16 %v1295
        %v1424 = vunpack.c.l.b16 %v1296
        %v1425 = vunpack.c.l.b16 %v1297
        %v1426 = vunpack.c.l.b16 %v1298
        %v1427 = vunpack.c.l.b16 %v1299
        %v1428 = vunpack.c.l.b16 %v1300
        %v1429 = vunpack.c.l.b16 %v1301
        %v1430 = vunpack.c.l.b16 %v1302
        %v1431 = vunpack.c.l.b16 %v1303
        %v1432 = vunpack.c.l.b16 %v1304
        %v1433 = vunpack.c.l.b16 %v1305
        %v1434 = vunpack.c.l.b16 %v1306
        %v1435 = vunpack.c.l.b16 %v1307
        %v1436 = vunpack.c.l.b16 %v1308
        %v1437 = vunpack.c.l.b16 %v1309
        %v1438 = vunpack.c.l.b16 %v1310
        %v1439 = vunpack.c.l.b16 %v1311
        %v1440 = vunpack.c.l.b16 %v1312
        %v1441 = vunpack.c.l.b16 %v1313
        %v1442 = vunpack.c.l.b16 %v1314
        %v1443 = vunpack.c.l.b16 %v1315
        %v1444 = vunpack.c.l.b16 %v1316
        %v1445 = vunpack.c.l.b16 %v1317
        %v1446 = vunpack.c.l.b16 %v1318
        %v1447 = vunpack.c.l.b16 %v1319
        %v1448 = vunpack.c.l.b16 %v1320
        %v1449 = vunpack.c.l.b16 %v1321
        %v1450 = vunpack.c.l.b16 %v1322
        %v1451 = vunpack.c.l.b16 %v1323
        %v1452 = vunpack.c.l.b16 %v1324
        %v1453 = vunpack.c.l.b16 %v1325
        %v1454 = vunpack.c.l.b16 %v1326
        %v1455 = vunpack.c.l.b16 %v1327
        %v1456 = vunpack.c.l.b16 %v1328
        %v1457 = vunpack.c.l.b16 %v1329
        %v1458 = vunpack.c.l.b16 %v1330
        %v1459 = vunpack.c.l.b16 %v1331
        %v1460 = vunpack.c.l.b16 %v1332
        %v1461 = vunpack.c.l.b16 %v1333
        %v1462 = vunpack.c.l.b16 %v1334
        %v1463 = vunpack.c.l.b16 %v1335
        %v1464 = vpack.c.b16 %v1401, %v1400
        %v1465 = vpack.c.b16 %v1403, %v1402
        %v1466 = vpack.c.b16 %v1405, %v1404
        %v1467 = vpack.c.b16 %v1407, %v1406
        %v1468 = vpack.c.b16 %v1409, %v1408
        %v1469 = vpack.c.b16 %v1411, %v1410
        %v1470 = vpack.c.b16 %v1413, %v1412
        %v1471 = vpack.c.b16 %v1415, %v1414
        %v1472 = vpack.c.b16 %v1417, %v1416
        %v1473 = vpack.c.b16 %v1419, %v1418
        %v1474 = vpack.c.b16 %v1421, %v1420
        %v1475 = vpack.c.b16 %v1423, %v1422
        %v1476 = vpack.c.b16 %v1425, %v1424
        %v1477 = vpack.c.b16 %v1427, %v1426
        %v1478 = vpack.c.b16 %v1429, %v1428
        %v1479 = vpack.c.b16 %v1431, %v1430
        %v1480 = vpack.c.b16 %v1433, %v1432
        %v1481 = vpack.c.b16 %v1435, %v1434
        %v1482 = vpack.c.b16 %v1437, %v1436
        %v1483 = vpack.c.b16 %v1439, %v1438
        %v1484 = vpack.c.b16 %v1441, %v1440
        %v1485 = vpack.c.b16 %v1443, %v1442
        %v1486 = vpack.c.b16 %v1445, %v1444
        %v1487 = vpack.c.b16 %v1447, %v1446
        %v1488 = vpack.c.b16 %v1449, %v1448
        %v1489 = vpack.c.b16 %v1451, %v1450
        %v1490 = vpack.c.b16 %v1453, %v1452
        %v1491 = vpack.c.b16 %v1455, %v1454
        %v1492 = vpack.c.b16 %v1457, %v1456
        %v1493 = vpack.c.b16 %v1459, %v1458
        %v1494 = vpack.c.b16 %v1461, %v1460
        %v1495 = vpack.c.b16 %v1463, %v1462
        %1528 = vmatprep.subr.bf16.mxu0 0
        %1529 = vmatpush1.bf16.msra.mxu0 %v1464
        %1530 = vmatprep.subr.bf16.mxu0 0
        %1531 = vmatpush1.bf16.msra.mxu0 %v1465
        %1532 = vmatprep.subr.bf16.mxu0 0
        %1533 = vmatpush1.bf16.msra.mxu0 %v1466
        %1534 = vmatprep.subr.bf16.mxu0 0
        %1535 = vmatpush1.bf16.msra.mxu0 %v1467
        %1536 = vmatprep.subr.bf16.mxu0 0
        %1537 = vmatpush1.bf16.msra.mxu0 %v1468
        %1538 = vmatprep.subr.bf16.mxu0 0
        %1539 = vmatpush1.bf16.msra.mxu0 %v1469
        %1540 = vmatprep.subr.bf16.mxu0 0
        %1541 = vmatpush1.bf16.msra.mxu0 %v1470
        %1542 = vmatprep.subr.bf16.mxu0 0
        %1543 = vmatpush1.bf16.msra.mxu0 %v1471
        %1544 = vmatprep.subr.bf16.mxu0 0
        %1545 = vmatpush1.bf16.msra.mxu0 %v1472
        %1546 = vmatprep.subr.bf16.mxu0 0
        %1547 = vmatpush1.bf16.msra.mxu0 %v1473
        %1548 = vmatprep.subr.bf16.mxu0 0
        %1549 = vmatpush1.bf16.msra.mxu0 %v1474
        %1550 = vmatprep.subr.bf16.mxu0 0
        %1551 = vmatpush1.bf16.msra.mxu0 %v1475
        %1552 = vmatprep.subr.bf16.mxu0 0
        %1553 = vmatpush1.bf16.msra.mxu0 %v1476
        %1554 = vmatprep.subr.bf16.mxu0 0
        %1555 = vmatpush1.bf16.msra.mxu0 %v1477
        %1556 = vmatprep.subr.bf16.mxu0 0
        %1557 = vmatpush1.bf16.msra.mxu0 %v1478
        %1558 = vmatprep.subr.bf16.mxu0 0
        %1559 = vmatpush1.bf16.msra.mxu0 %v1479
        %1560 = vmatprep.mubr.bf16.mxu0 %v1265
        %1561 = vmatmul.mubr.bf16.gmra.mrb[0].mxu0 %v1264
        %v1562 = vpop.f32.mrb[0].mxu0
        %v1563 = vadd.f32 0.0, %v1562
        %v1564 = vpop.f32.mrb[0].mxu0
        %v1565 = vpop.f32.mrb[0].mxu0
        %v1566 = vadd.f32 0.0, %v1565
        %v1567 = vpop.f32.mrb[0].mxu0
        %1568 = vmatprep.mubr.bf16.mxu0 %v1269
        %1569 = vmatmul.mubr.bf16.gmra.mrb[0].mxu0 %v1268
        %v1570 = vpop.f32.mrb[0].mxu0
        %v1571 = vadd.f32 0.0, %v1570
        %v1572 = vpop.f32.mrb[0].mxu0
        %v1573 = vpop.f32.mrb[0].mxu0
        %v1574 = vadd.f32 0.0, %v1573
        %v1575 = vpop.f32.mrb[0].mxu0
        %1576 = vdwg.mxu0
        %1577 = vmatprep.subr.bf16.mxu0 0
        %1578 = vmatpush1.bf16.msra.mxu0 %v1480
        %1579 = vmatprep.subr.bf16.mxu0 0
        %1580 = vmatpush1.bf16.msra.mxu0 %v1481
        %1581 = vmatprep.subr.bf16.mxu0 0
        %1582 = vmatpush1.bf16.msra.mxu0 %v1482
        %1583 = vmatprep.subr.bf16.mxu0 0
        %1584 = vmatpush1.bf16.msra.mxu0 %v1483
        %1585 = vmatprep.subr.bf16.mxu0 0
        %1586 = vmatpush1.bf16.msra.mxu0 %v1484
        %1587 = vmatprep.subr.bf16.mxu0 0
        %1588 = vmatpush1.bf16.msra.mxu0 %v1485
        %1589 = vmatprep.subr.bf16.mxu0 0
        %1590 = vmatpush1.bf16.msra.mxu0 %v1486
        %1591 = vmatprep.subr.bf16.mxu0 0
        %1592 = vmatpush1.bf16.msra.mxu0 %v1487
        %1593 = vmatprep.subr.bf16.mxu0 0
        %1594 = vmatpush1.bf16.msra.mxu0 %v1488
        %1595 = vmatprep.subr.bf16.mxu0 0
        %1596 = vmatpush1.bf16.msra.mxu0 %v1489
        %1597 = vmatprep.subr.bf16.mxu0 0
        %1598 = vmatpush1.bf16.msra.mxu0 %v1490
        %1599 = vmatprep.subr.bf16.mxu0 0
        %1600 = vmatpush1.bf16.msra.mxu0 %v1491
        %1601 = vmatprep.subr.bf16.mxu0 0
        %1602 = vmatpush1.bf16.msra.mxu0 %v1492
        %1603 = vmatprep.subr.bf16.mxu0 0
        %1604 = vmatpush1.bf16.msra.mxu0 %v1493
        %1605 = vmatprep.subr.bf16.mxu0 0
        %1606 = vmatpush1.bf16.msra.mxu0 %v1494
        %1607 = vmatprep.subr.bf16.mxu0 0
        %1608 = vmatpush1.bf16.msra.mxu0 %v1495
        %1609 = vmatprep.mubr.bf16.mxu0 %v1267
        %1610 = vmatmul.mubr.bf16.gmra.mrb[0].mxu0 %v1266
        %v1611 = vpop.f32.mrb[0].mxu0
        %v1612 = vadd.f32 %v1563, %v1611
        %v1613 = vpop.f32.mrb[0].mxu0
        %v1614 = vpop.f32.mrb[0].mxu0
        %v1615 = vadd.f32 %v1566, %v1614
        %v1616 = vpop.f32.mrb[0].mxu0
        %1617 = vmatprep.mubr.bf16.mxu0 %v1271
        %1618 = vmatmul.mubr.bf16.gmra.mrb[0].mxu0 %v1270
        %v1619 = vpop.f32.mrb[0].mxu0
        %v1620 = vadd.f32 %v1571, %v1619
        %v1621 = vpop.f32.mrb[0].mxu0
        %v1622 = vpop.f32.mrb[0].mxu0
        %v1623 = vadd.f32 %v1574, %v1622
        %v1624 = vpop.f32.mrb[0].mxu0
        %1625 = vdwg.mxu0
        %v1626 = vadd.f32 %v1260, %v1612
        %v1627 = vadd.f32 %v1261, %v1615
        %v1628 = vadd.f32 %v1262, %v1620
        %v1629 = vadd.f32 %v1263, %v1623
        %1630 = vst.msk [vmem:[#allocation3] sm:$0xff] %vm1075, %v1626
        %1631 = vst.msk [vmem:[#allocation3 + $0x8] sm:$0xff] %vm1075, %v1627
        %1632 = vst.msk [vmem:[#allocation3 + $0x10] sm:$0xff] %vm1075, %v1628
        %1633 = vst.msk [vmem:[#allocation3 + $0x18] sm:$0xff] %vm1075, %v1629
        %p1634 = scmp.eq.s32.totalorder %s24, 3
        // Predicated region
        $region107: #{push_grasp_net_forward.1} parent=93 // pred_check
          %p1635 = pneg %p1634
        $region108: #{push_grasp_net_forward.1} parent=93 // pred_check_branch
          %1637 = sbr.rel (%p1635) target = $region110
        $region109: #{push_grasp_net_forward.1} parent=93 // pred_region
          %v1638 = vld [vmem:[#allocation2] sm:$0xff]
          %v1639 = vld [vmem:[#allocation2 + $0x8] sm:$0xff]
          %v1640 = vld [vmem:[#allocation2 + $0x10] sm:$0xff]
          %v1641 = vld [vmem:[#allocation2 + $0x18] sm:$0xff]
          %v1642 = vsel %vm1075, %v1638, 0.0
          %v1643 = vsel %vm1075, %v1639, 0.0
          %v1644 = vadd.f32 %v1642, %v1643
          %v1645 = vsel %vm1075, %v1640, 0.0
          %v1646 = vadd.f32 %v1644, %v1645
          %v1647 = vsel %vm1075, %v1641, 0.0
          %v1648 = vadd.f32 %v1646, %v1647
          %v1649 = vrot.slane %v1648, 4
          %v1650 = vadd.f32 %v1648, %v1649
          %v1651 = vrot.slane %v1650, 2
          %v1652 = vadd.f32 %v1650, %v1651
          %v1653 = vrot.slane %v1652, 1
          %v1654 = vadd.f32 %v1652, %v1653
          %v1655 = vmul.f32 %v1654, 0.03125
          %v1656 = vmul.f32 %v1638, %v1638
          %v1657 = vmul.f32 %v1639, %v1639
          %v1658 = vmul.f32 %v1640, %v1640
          %v1659 = vmul.f32 %v1641, %v1641
          %v1660 = vsel %vm1075, %v1656, 0.0
          %v1661 = vsel %vm1075, %v1657, 0.0
          %v1662 = vadd.f32 %v1660, %v1661
          %v1663 = vsel %vm1075, %v1658, 0.0
          %v1664 = vadd.f32 %v1662, %v1663
          %v1665 = vsel %vm1075, %v1659, 0.0
          %v1666 = vadd.f32 %v1664, %v1665
          %v1667 = vrot.slane %v1666, 4
          %v1668 = vadd.f32 %v1666, %v1667
          %v1669 = vrot.slane %v1668, 2
          %v1670 = vadd.f32 %v1668, %v1669
          %v1671 = vrot.slane %v1670, 1
          %v1672 = vadd.f32 %v1670, %v1671
          %v1673 = vmul.f32 %v1672, 0.03125
          %v1674 = vmul.f32 %v1655, %v1655
          %v1675 = vsub.f32 %v1673, %v1674
          %v1676 = vmax.f32 %v1675, 0.0
          %v1677 = vsub.f32 %v1638, %v1655
          %v1678 = vsub.f32 %v1639, %v1655
          %v1679 = vsub.f32 %v1640, %v1655
          %v1680 = vsub.f32 %v1641, %v1655
          %v1681 = vadd.f32 %v1676, 1e-05
          %v1682 = vrsqrt.pop %v1681
          %v1683 = vmul.f32 %v1677, %v1682
          %v1684 = vmul.f32 %v1678, %v1682
          %v1685 = vmul.f32 %v1679, %v1682
          %v1686 = vmul.f32 %v1680, %v1682
          %v1687 = vmax.f32 %v1683, 0.0
          %v1688 = vmax.f32 %v1684, 0.0
          %v1689 = vmax.f32 %v1685, 0.0
          %v1690 = vmax.f32 %v1686, 0.0
          %v1691 = vld [vmem:[%s6] sm:$0xf]
          %v1692 = vld [vmem:[%s6 + $0x4] sm:$0xf]
          %v1693 = vld [vmem:[%s6 + $0x8] sm:$0xf]
          %v1694 = vld [vmem:[%s6 + $0xc] sm:$0xf]
          %v1695 = vpack.c.bf16 %v1688, %v1687
          %v1696 = vpack.c.bf16 %v1690, %v1689
          %v1701 = vunpack.c.l.b16 %v1691
          %v1702 = vunpack.c.l.b16 %v1692
          %v1703 = vunpack.c.l.b16 %v1693
          %v1704 = vunpack.c.l.b16 %v1694
          %v1705 = vpack.c.b16 %v1702, %v1701
          %v1706 = vpack.c.b16 %v1704, %v1703
          %vm1707 = vcmask 261120
          %v1709 = vsel %vm1707, %v1705, 0
          %v1712 = vsel %vm1707, %v1706, 0
          %1714 = vmatprep.subr.bf16.mxu0 0
          %1715 = vmatpush1.bf16.msra.mxu0 %v1695
          %1716 = vmatprep.subr.bf16.mxu0 0
          %1717 = vmatpush1.bf16.msra.mxu0 %v1696
          %1718 = vmatprep.subr.bf16.mxu0 0
          %1719 = vmatpush1.bf16.msra.mxu0 0
          %1720 = vmatprep.subr.bf16.mxu0 0
          %1721 = vmatpush1.bf16.msra.mxu0 0
          %1722 = vmatprep.subr.bf16.mxu0 0
          %1723 = vmatpush1.bf16.msra.mxu0 0
          %1724 = vmatprep.subr.bf16.mxu0 0
          %1725 = vmatpush1.bf16.msra.mxu0 0
          %1726 = vmatprep.subr.bf16.mxu0 0
          %1727 = vmatpush1.bf16.msra.mxu0 0
          %1728 = vmatprep.subr.bf16.mxu0 0
          %1729 = vmatpush1.bf16.msra.mxu0 0
          %1730 = vmatprep.subr.bf16.mxu0 0
          %1731 = vmatpush1.bf16.msra.mxu0 0
          %1732 = vmatprep.subr.bf16.mxu0 0
          %1733 = vmatpush1.bf16.msra.mxu0 0
          %1734 = vmatprep.subr.bf16.mxu0 0
          %1735 = vmatpush1.bf16.msra.mxu0 0
          %1736 = vmatprep.subr.bf16.mxu0 0
          %1737 = vmatpush1.bf16.msra.mxu0 0
          %1738 = vmatprep.subr.bf16.mxu0 0
          %1739 = vmatpush1.bf16.msra.mxu0 0
          %1740 = vmatprep.subr.bf16.mxu0 0
          %1741 = vmatpush1.bf16.msra.mxu0 0
          %1742 = vmatprep.subr.bf16.mxu0 0
          %1743 = vmatpush1.bf16.msra.mxu0 0
          %1744 = vmatprep.subr.bf16.mxu0 0
          %1745 = vmatpush1.bf16.msra.mxu0 0
          %1746 = vmatprep.mubr.bf16.mxu0 0
          %1747 = vmatmul.mubr.bf16.gmra.mrb[0].mxu0 %v1709
          %v1748 = vpop.f32.mrb[0].mxu0
          %v1749 = vadd.f32 0.0, %v1748
          %v1750 = vpop.f32.mrb[0].mxu0
          %v1751 = vpop.f32.mrb[0].mxu0
          %v1752 = vadd.f32 0.0, %v1751
          %v1753 = vpop.f32.mrb[0].mxu0
          %1754 = vmatprep.mubr.bf16.mxu0 0
          %1755 = vmatmul.mubr.bf16.gmra.mrb[0].mxu0 %v1712
          %v1756 = vpop.f32.mrb[0].mxu0
          %v1757 = vadd.f32 0.0, %v1756
          %v1758 = vpop.f32.mrb[0].mxu0
          %v1759 = vpop.f32.mrb[0].mxu0
          %v1760 = vadd.f32 0.0, %v1759
          %v1761 = vpop.f32.mrb[0].mxu0
          %1762 = vdwg.mxu0
          %v1763 = vld [vmem:[%s4] sm:$0x1]
          %v1765 = vlaneseq
          %v1766 = vshrl.u32 %v1765, 7
          %v1767 = vsub.s32 0, %v1766
          %v1768 = vrot.slane %v1763, %v1767
          %v1770 = vmul.f32 %v1749, %v1768
          %v1771 = vmul.f32 %v1752, %v1768
          %v1772 = vmul.f32 %v1757, %v1768
          %v1773 = vmul.f32 %v1760, %v1768
          %v1774 = vsel %vm1075, %v1770, 0.0
          %1775 = vadd.xlane.f32.xlu0 %v1774
          %v1776 = vpop.xlane.xlu0 %1775
          %v1777 = vsel %vm1075, %v1771, 0.0
          %1778 = vadd.xlane.f32.xlu0 %v1777
          %v1779 = vpop.xlane.xlu0 %1778
          %v1780 = vsel %vm1075, %v1772, 0.0
          %1781 = vadd.xlane.f32.xlu0 %v1780
          %v1782 = vpop.xlane.xlu0 %1781
          %v1783 = vsel %vm1075, %v1773, 0.0
          %1784 = vadd.xlane.f32.xlu0 %v1783
          %v1785 = vpop.xlane.xlu0 %1784
          %v1786 = vld [vmem:[%s7] sm:$0xff]
          %v1787 = vld [vmem:[%s7 + $0x8] sm:$0xff]
          %v1788 = vld [vmem:[%s7 + $0x10] sm:$0xff]
          %v1789 = vld [vmem:[%s7 + $0x18] sm:$0xff]
          %v1790 = vmul.f32 %v1776, %v1786
          %v1791 = vmul.f32 %v1779, %v1787
          %v1792 = vmul.f32 %v1782, %v1788
          %v1793 = vmul.f32 %v1785, %v1789
          %v1794 = vpack.c.bf16 %v1791, %v1790
          %v1795 = vpack.c.bf16 %v1793, %v1792
          %v1796 = vld [vmem:[%s8] sm:$0xf]
          %v1797 = vld [vmem:[%s8 + $0x4] sm:$0xf]
          %v1798 = vld [vmem:[%s8 + $0x8] sm:$0xf]
          %v1799 = vld [vmem:[%s8 + $0xc] sm:$0xf]
          %v1800 = vld [vmem:[%s8 + $0x10] sm:$0xf]
          %v1801 = vld [vmem:[%s8 + $0x14] sm:$0xf]
          %v1802 = vld [vmem:[%s8 + $0x18] sm:$0xf]
          %v1803 = vld [vmem:[%s8 + $0x1c] sm:$0xf]
          %v1804 = vld [vmem:[%s8 + $0x20] sm:$0xf]
          %v1805 = vld [vmem:[%s8 + $0x24] sm:$0xf]
          %v1806 = vld [vmem:[%s8 + $0x28] sm:$0xf]
          %v1807 = vld [vmem:[%s8 + $0x2c] sm:$0xf]
          %v1808 = vld [vmem:[%s8 + $0x30] sm:$0xf]
          %v1809 = vld [vmem:[%s8 + $0x34] sm:$0xf]
          %v1810 = vld [vmem:[%s8 + $0x38] sm:$0xf]
          %v1811 = vld [vmem:[%s8 + $0x3c] sm:$0xf]
          %v1828 = vunpack.c.l.b16 %v1796
          %v1829 = vunpack.c.l.b16 %v1797
          %v1830 = vunpack.c.l.b16 %v1798
          %v1831 = vunpack.c.l.b16 %v1799
          %v1832 = vunpack.c.l.b16 %v1800
          %v1833 = vunpack.c.l.b16 %v1801
          %v1834 = vunpack.c.l.b16 %v1802
          %v1835 = vunpack.c.l.b16 %v1803
          %v1836 = vunpack.c.l.b16 %v1804
          %v1837 = vunpack.c.l.b16 %v1805
          %v1838 = vunpack.c.l.b16 %v1806
          %v1839 = vunpack.c.l.b16 %v1807
          %v1840 = vunpack.c.l.b16 %v1808
          %v1841 = vunpack.c.l.b16 %v1809
          %v1842 = vunpack.c.l.b16 %v1810
          %v1843 = vunpack.c.l.b16 %v1811
          %v1844 = vpack.c.b16 %v1829, %v1828
          %v1845 = vpack.c.b16 %v1831, %v1830
          %v1846 = vpack.c.b16 %v1833, %v1832
          %v1847 = vpack.c.b16 %v1835, %v1834
          %v1848 = vpack.c.b16 %v1837, %v1836
          %v1849 = vpack.c.b16 %v1839, %v1838
          %v1850 = vpack.c.b16 %v1841, %v1840
          %v1851 = vpack.c.b16 %v1843, %v1842
          %v1853 = vsel %vm1707, %v1844, 0
          %v1856 = vsel %vm1707, %v1845, 0
          %v1859 = vsel %vm1707, %v1846, 0
          %v1862 = vsel %vm1707, %v1847, 0
          %v1865 = vsel %vm1707, %v1848, 0
          %v1868 = vsel %vm1707, %v1849, 0
          %v1871 = vsel %vm1707, %v1850, 0
          %v1874 = vsel %vm1707, %v1851, 0
          %1876 = vmatprep.subr.bf16.mxu0 0
          %1877 = vmatpush1.bf16.msra.mxu0 %v1794
          %1878 = vmatprep.subr.bf16.mxu0 0
          %1879 = vmatpush1.bf16.msra.mxu0 %v1795
          %1880 = vmatprep.subr.bf16.mxu0 0
          %1881 = vmatpush1.bf16.msra.mxu0 0
          %1882 = vmatprep.subr.bf16.mxu0 0
          %1883 = vmatpush1.bf16.msra.mxu0 0
          %1884 = vmatprep.subr.bf16.mxu0 0
          %1885 = vmatpush1.bf16.msra.mxu0 0
          %1886 = vmatprep.subr.bf16.mxu0 0
          %1887 = vmatpush1.bf16.msra.mxu0 0
          %1888 = vmatprep.subr.bf16.mxu0 0
          %1889 = vmatpush1.bf16.msra.mxu0 0
          %1890 = vmatprep.subr.bf16.mxu0 0
          %1891 = vmatpush1.bf16.msra.mxu0 0
          %1892 = vmatprep.subr.bf16.mxu0 0
          %1893 = vmatpush1.bf16.msra.mxu0 0
          %1894 = vmatprep.subr.bf16.mxu0 0
          %1895 = vmatpush1.bf16.msra.mxu0 0
          %1896 = vmatprep.subr.bf16.mxu0 0
          %1897 = vmatpush1.bf16.msra.mxu0 0
          %1898 = vmatprep.subr.bf16.mxu0 0
          %1899 = vmatpush1.bf16.msra.mxu0 0
          %1900 = vmatprep.subr.bf16.mxu0 0
          %1901 = vmatpush1.bf16.msra.mxu0 0
          %1902 = vmatprep.subr.bf16.mxu0 0
          %1903 = vmatpush1.bf16.msra.mxu0 0
          %1904 = vmatprep.subr.bf16.mxu0 0
          %1905 = vmatpush1.bf16.msra.mxu0 0
          %1906 = vmatprep.subr.bf16.mxu0 0
          %1907 = vmatpush1.bf16.msra.mxu0 0
          %1908 = vmatprep.mubr.bf16.mxu0 0
          %1909 = vmatmul.mubr.bf16.gmra.mrb[0].mxu0 %v1853
          %v1910 = vpop.f32.mrb[0].mxu0
          %v1911 = vadd.f32 0.0, %v1910
          %v1912 = vpop.f32.mrb[0].mxu0
          %v1913 = vpop.f32.mrb[0].mxu0
          %v1914 = vadd.f32 0.0, %v1913
          %v1915 = vpop.f32.mrb[0].mxu0
          %1916 = vmatprep.mubr.bf16.mxu0 0
          %1917 = vmatmul.mubr.bf16.gmra.mrb[0].mxu0 %v1856
          %v1918 = vpop.f32.mrb[0].mxu0
          %v1919 = vadd.f32 0.0, %v1918
          %v1920 = vpop.f32.mrb[0].mxu0
          %v1921 = vpop.f32.mrb[0].mxu0
          %v1922 = vadd.f32 0.0, %v1921
          %v1923 = vpop.f32.mrb[0].mxu0
          %1924 = vmatprep.mubr.bf16.mxu0 0
          %1925 = vmatmul.mubr.bf16.gmra.mrb[0].mxu0 %v1859
          %v1926 = vpop.f32.mrb[0].mxu0
          %v1927 = vadd.f32 0.0, %v1926
          %v1928 = vpop.f32.mrb[0].mxu0
          %v1929 = vpop.f32.mrb[0].mxu0
          %v1930 = vadd.f32 0.0, %v1929
          %v1931 = vpop.f32.mrb[0].mxu0
          %1932 = vmatprep.mubr.bf16.mxu0 0
          %1933 = vmatmul.mubr.bf16.gmra.mrb[0].mxu0 %v1862
          %v1934 = vpop.f32.mrb[0].mxu0
          %v1935 = vadd.f32 0.0, %v1934
          %v1936 = vpop.f32.mrb[0].mxu0
          %v1937 = vpop.f32.mrb[0].mxu0
          %v1938 = vadd.f32 0.0, %v1937
          %v1939 = vpop.f32.mrb[0].mxu0
          %1940 = vmatprep.mubr.bf16.mxu0 0
          %1941 = vmatmul.mubr.bf16.gmra.mrb[0].mxu0 %v1865
          %v1942 = vpop.f32.mrb[0].mxu0
          %v1943 = vadd.f32 0.0, %v1942
          %v1944 = vpop.f32.mrb[0].mxu0
          %v1945 = vpop.f32.mrb[0].mxu0
          %v1946 = vadd.f32 0.0, %v1945
          %v1947 = vpop.f32.mrb[0].mxu0
          %1948 = vmatprep.mubr.bf16.mxu0 0
          %1949 = vmatmul.mubr.bf16.gmra.mrb[0].mxu0 %v1868
          %v1950 = vpop.f32.mrb[0].mxu0
          %v1951 = vadd.f32 0.0, %v1950
          %v1952 = vpop.f32.mrb[0].mxu0
          %v1953 = vpop.f32.mrb[0].mxu0
          %v1954 = vadd.f32 0.0, %v1953
          %v1955 = vpop.f32.mrb[0].mxu0
          %1956 = vmatprep.mubr.bf16.mxu0 0
          %1957 = vmatmul.mubr.bf16.gmra.mrb[0].mxu0 %v1871
          %v1958 = vpop.f32.mrb[0].mxu0
          %v1959 = vadd.f32 0.0, %v1958
          %v1960 = vpop.f32.mrb[0].mxu0
          %v1961 = vpop.f32.mrb[0].mxu0
          %v1962 = vadd.f32 0.0, %v1961
          %v1963 = vpop.f32.mrb[0].mxu0
          %1964 = vmatprep.mubr.bf16.mxu0 0
          %1965 = vmatmul.mubr.bf16.gmra.mrb[0].mxu0 %v1874
          %v1966 = vpop.f32.mrb[0].mxu0
          %v1967 = vadd.f32 0.0, %v1966
          %v1968 = vpop.f32.mrb[0].mxu0
          %v1969 = vpop.f32.mrb[0].mxu0
          %v1970 = vadd.f32 0.0, %v1969
          %v1971 = vpop.f32.mrb[0].mxu0
          %1972 = vdwg.mxu0
          %1973 = vst.msk [vmem:[#allocation6] sm:$0xff] %vm1075, %v1911
          %1974 = vst.msk [vmem:[#allocation6 + $0x8] sm:$0xff] %vm1075, %v1914
          %1975 = vst.msk [vmem:[#allocation6 + $0x10] sm:$0xff] %vm1075, %v1919
          %1976 = vst.msk [vmem:[#allocation6 + $0x18] sm:$0xff] %vm1075, %v1922
          %1977 = vst.msk [vmem:[#allocation6 + $0x20] sm:$0xff] %vm1075, %v1927
          %1978 = vst.msk [vmem:[#allocation6 + $0x28] sm:$0xff] %vm1075, %v1930
          %1979 = vst.msk [vmem:[#allocation6 + $0x30] sm:$0xff] %vm1075, %v1935
          %1980 = vst.msk [vmem:[#allocation6 + $0x38] sm:$0xff] %vm1075, %v1938
          %1981 = vst.msk [vmem:[#allocation6 + $0x40] sm:$0xff] %vm1075, %v1943
          %1982 = vst.msk [vmem:[#allocation6 + $0x48] sm:$0xff] %vm1075, %v1946
          %1983 = vst.msk [vmem:[#allocation6 + $0x50] sm:$0xff] %vm1075, %v1951
          %1984 = vst.msk [vmem:[#allocation6 + $0x58] sm:$0xff] %vm1075, %v1954
          %1985 = vst.msk [vmem:[#allocation6 + $0x60] sm:$0xff] %vm1075, %v1959
          %1986 = vst.msk [vmem:[#allocation6 + $0x68] sm:$0xff] %vm1075, %v1962
          %1987 = vst.msk [vmem:[#allocation6 + $0x70] sm:$0xff] %vm1075, %v1967
          %1988 = vst.msk [vmem:[#allocation6 + $0x78] sm:$0xff] %vm1075, %v1970
          %v1989 = vld [vmem:[#allocation3] sm:$0xff]
          %v1990 = vld [vmem:[#allocation3 + $0x8] sm:$0xff]
          %v1991 = vld [vmem:[#allocation3 + $0x10] sm:$0xff]
          %v1992 = vld [vmem:[#allocation3 + $0x18] sm:$0xff]
          %v1993 = vsel %vm1075, %v1989, 0.0
          %v1994 = vsel %vm1075, %v1990, 0.0
          %v1995 = vadd.f32 %v1993, %v1994
          %v1996 = vsel %vm1075, %v1991, 0.0
          %v1997 = vadd.f32 %v1995, %v1996
          %v1998 = vsel %vm1075, %v1992, 0.0
          %v1999 = vadd.f32 %v1997, %v1998
          %v2000 = vrot.slane %v1999, 4
          %v2001 = vadd.f32 %v1999, %v2000
          %v2002 = vrot.slane %v2001, 2
          %v2003 = vadd.f32 %v2001, %v2002
          %v2004 = vrot.slane %v2003, 1
          %v2005 = vadd.f32 %v2003, %v2004
          %v2006 = vmul.f32 %v2005, 0.03125
          %v2007 = vmul.f32 %v1989, %v1989
          %v2008 = vmul.f32 %v1990, %v1990
          %v2009 = vmul.f32 %v1991, %v1991
          %v2010 = vmul.f32 %v1992, %v1992
          %v2011 = vsel %vm1075, %v2007, 0.0
          %v2012 = vsel %vm1075, %v2008, 0.0
          %v2013 = vadd.f32 %v2011, %v2012
          %v2014 = vsel %vm1075, %v2009, 0.0
          %v2015 = vadd.f32 %v2013, %v2014
          %v2016 = vsel %vm1075, %v2010, 0.0
          %v2017 = vadd.f32 %v2015, %v2016
          %v2018 = vrot.slane %v2017, 4
          %v2019 = vadd.f32 %v2017, %v2018
          %v2020 = vrot.slane %v2019, 2
          %v2021 = vadd.f32 %v2019, %v2020
          %v2022 = vrot.slane %v2021, 1
          %v2023 = vadd.f32 %v2021, %v2022
          %v2024 = vmul.f32 %v2023, 0.03125
          %v2025 = vmul.f32 %v2006, %v2006
          %v2026 = vsub.f32 %v2024, %v2025
          %v2027 = vmax.f32 %v2026, 0.0
          %v2028 = vsub.f32 %v1989, %v2006
          %v2029 = vsub.f32 %v1990, %v2006
          %v2030 = vsub.f32 %v1991, %v2006
          %v2031 = vsub.f32 %v1992, %v2006
          %v2032 = vadd.f32 %v2027, 1e-05
          %v2033 = vrsqrt.pop %v2032
          %v2034 = vmul.f32 %v2028, %v2033
          %v2035 = vmul.f32 %v2029, %v2033
          %v2036 = vmul.f32 %v2030, %v2033
          %v2037 = vmul.f32 %v2031, %v2033
          %v2038 = vmax.f32 %v2034, 0.0
          %v2039 = vmax.f32 %v2035, 0.0
          %v2040 = vmax.f32 %v2036, 0.0
          %v2041 = vmax.f32 %v2037, 0.0
          %v2042 = vld [vmem:[%s6] sm:$0xf]
          %v2043 = vld [vmem:[%s6 + $0x4] sm:$0xf]
          %v2044 = vld [vmem:[%s6 + $0x8] sm:$0xf]
          %v2045 = vld [vmem:[%s6 + $0xc] sm:$0xf]
          %v2046 = vpack.c.bf16 %v2039, %v2038
          %v2047 = vpack.c.bf16 %v2041, %v2040
          %v2052 = vunpack.c.l.b16 %v2042
          %v2053 = vunpack.c.l.b16 %v2043
          %v2054 = vunpack.c.l.b16 %v2044
          %v2055 = vunpack.c.l.b16 %v2045
          %v2056 = vpack.c.b16 %v2053, %v2052
          %v2057 = vpack.c.b16 %v2055, %v2054
          %v2059 = vsel %vm1707, %v2056, 0
          %v2062 = vsel %vm1707, %v2057, 0
          %2064 = vmatprep.subr.bf16.mxu0 0
          %2065 = vmatpush1.bf16.msra.mxu0 %v2046
          %2066 = vmatprep.subr.bf16.mxu0 0
          %2067 = vmatpush1.bf16.msra.mxu0 %v2047
          %2068 = vmatprep.subr.bf16.mxu0 0
          %2069 = vmatpush1.bf16.msra.mxu0 0
          %2070 = vmatprep.subr.bf16.mxu0 0
          %2071 = vmatpush1.bf16.msra.mxu0 0
          %2072 = vmatprep.subr.bf16.mxu0 0
          %2073 = vmatpush1.bf16.msra.mxu0 0
          %2074 = vmatprep.subr.bf16.mxu0 0
          %2075 = vmatpush1.bf16.msra.mxu0 0
          %2076 = vmatprep.subr.bf16.mxu0 0
          %2077 = vmatpush1.bf16.msra.mxu0 0
          %2078 = vmatprep.subr.bf16.mxu0 0
          %2079 = vmatpush1.bf16.msra.mxu0 0
          %2080 = vmatprep.subr.bf16.mxu0 0
          %2081 = vmatpush1.bf16.msra.mxu0 0
          %2082 = vmatprep.subr.bf16.mxu0 0
          %2083 = vmatpush1.bf16.msra.mxu0 0
          %2084 = vmatprep.subr.bf16.mxu0 0
          %2085 = vmatpush1.bf16.msra.mxu0 0
          %2086 = vmatprep.subr.bf16.mxu0 0
          %2087 = vmatpush1.bf16.msra.mxu0 0
          %2088 = vmatprep.subr.bf16.mxu0 0
          %2089 = vmatpush1.bf16.msra.mxu0 0
          %2090 = vmatprep.subr.bf16.mxu0 0
          %2091 = vmatpush1.bf16.msra.mxu0 0
          %2092 = vmatprep.subr.bf16.mxu0 0
          %2093 = vmatpush1.bf16.msra.mxu0 0
          %2094 = vmatprep.subr.bf16.mxu0 0
          %2095 = vmatpush1.bf16.msra.mxu0 0
          %2096 = vmatprep.mubr.bf16.mxu0 0
          %2097 = vmatmul.mubr.bf16.gmra.mrb[0].mxu0 %v2059
          %v2098 = vpop.f32.mrb[0].mxu0
          %v2099 = vadd.f32 0.0, %v2098
          %v2100 = vpop.f32.mrb[0].mxu0
          %v2101 = vpop.f32.mrb[0].mxu0
          %v2102 = vadd.f32 0.0, %v2101
          %v2103 = vpop.f32.mrb[0].mxu0
          %2104 = vmatprep.mubr.bf16.mxu0 0
          %2105 = vmatmul.mubr.bf16.gmra.mrb[0].mxu0 %v2062
          %v2106 = vpop.f32.mrb[0].mxu0
          %v2107 = vadd.f32 0.0, %v2106
          %v2108 = vpop.f32.mrb[0].mxu0
          %v2109 = vpop.f32.mrb[0].mxu0
          %v2110 = vadd.f32 0.0, %v2109
          %v2111 = vpop.f32.mrb[0].mxu0
          %2112 = vdwg.mxu0
          %v2113 = vld [vmem:[%s5] sm:$0x1]
          %v2115 = vlaneseq
          %v2116 = vshrl.u32 %v2115, 7
          %v2117 = vsub.s32 0, %v2116
          %v2118 = vrot.slane %v2113, %v2117
          %v2120 = vmul.f32 %v2099, %v2118
          %v2121 = vmul.f32 %v2102, %v2118
          %v2122 = vmul.f32 %v2107, %v2118
          %v2123 = vmul.f32 %v2110, %v2118
          %v2124 = vsel %vm1075, %v2120, 0.0
          %2125 = vadd.xlane.f32.xlu0 %v2124
          %v2126 = vpop.xlane.xlu0 %2125
          %v2127 = vsel %vm1075, %v2121, 0.0
          %2128 = vadd.xlane.f32.xlu0 %v2127
          %v2129 = vpop.xlane.xlu0 %2128
          %v2130 = vsel %vm1075, %v2122, 0.0
          %2131 = vadd.xlane.f32.xlu0 %v2130
          %v2132 = vpop.xlane.xlu0 %2131
          %v2133 = vsel %vm1075, %v2123, 0.0
          %2134 = vadd.xlane.f32.xlu0 %v2133
          %v2135 = vpop.xlane.xlu0 %2134
          %v2136 = vld [vmem:[%s7] sm:$0xff]
          %v2137 = vld [vmem:[%s7 + $0x8] sm:$0xff]
          %v2138 = vld [vmem:[%s7 + $0x10] sm:$0xff]
          %v2139 = vld [vmem:[%s7 + $0x18] sm:$0xff]
          %v2140 = vmul.f32 %v2126, %v2136
          %v2141 = vmul.f32 %v2129, %v2137
          %v2142 = vmul.f32 %v2132, %v2138
          %v2143 = vmul.f32 %v2135, %v2139
          %v2144 = vpack.c.bf16 %v2141, %v2140
          %v2145 = vpack.c.bf16 %v2143, %v2142
          %v2146 = vld [vmem:[%s8] sm:$0xf]
          %v2147 = vld [vmem:[%s8 + $0x4] sm:$0xf]
          %v2148 = vld [vmem:[%s8 + $0x8] sm:$0xf]
          %v2149 = vld [vmem:[%s8 + $0xc] sm:$0xf]
          %v2150 = vld [vmem:[%s8 + $0x10] sm:$0xf]
          %v2151 = vld [vmem:[%s8 + $0x14] sm:$0xf]
          %v2152 = vld [vmem:[%s8 + $0x18] sm:$0xf]
          %v2153 = vld [vmem:[%s8 + $0x1c] sm:$0xf]
          %v2154 = vld [vmem:[%s8 + $0x20] sm:$0xf]
          %v2155 = vld [vmem:[%s8 + $0x24] sm:$0xf]
          %v2156 = vld [vmem:[%s8 + $0x28] sm:$0xf]
          %v2157 = vld [vmem:[%s8 + $0x2c] sm:$0xf]
          %v2158 = vld [vmem:[%s8 + $0x30] sm:$0xf]
          %v2159 = vld [vmem:[%s8 + $0x34] sm:$0xf]
          %v2160 = vld [vmem:[%s8 + $0x38] sm:$0xf]
          %v2161 = vld [vmem:[%s8 + $0x3c] sm:$0xf]
          %v2178 = vunpack.c.l.b16 %v2146
          %v2179 = vunpack.c.l.b16 %v2147
          %v2180 = vunpack.c.l.b16 %v2148
          %v2181 = vunpack.c.l.b16 %v2149
          %v2182 = vunpack.c.l.b16 %v2150
          %v2183 = vunpack.c.l.b16 %v2151
          %v2184 = vunpack.c.l.b16 %v2152
          %v2185 = vunpack.c.l.b16 %v2153
          %v2186 = vunpack.c.l.b16 %v2154
          %v2187 = vunpack.c.l.b16 %v2155
          %v2188 = vunpack.c.l.b16 %v2156
          %v2189 = vunpack.c.l.b16 %v2157
          %v2190 = vunpack.c.l.b16 %v2158
          %v2191 = vunpack.c.l.b16 %v2159
          %v2192 = vunpack.c.l.b16 %v2160
          %v2193 = vunpack.c.l.b16 %v2161
          %v2194 = vpack.c.b16 %v2179, %v2178
          %v2195 = vpack.c.b16 %v2181, %v2180
          %v2196 = vpack.c.b16 %v2183, %v2182
          %v2197 = vpack.c.b16 %v2185, %v2184
          %v2198 = vpack.c.b16 %v2187, %v2186
          %v2199 = vpack.c.b16 %v2189, %v2188
          %v2200 = vpack.c.b16 %v2191, %v2190
          %v2201 = vpack.c.b16 %v2193, %v2192
          %v2203 = vsel %vm1707, %v2194, 0
          %v2206 = vsel %vm1707, %v2195, 0
          %v2209 = vsel %vm1707, %v2196, 0
          %v2212 = vsel %vm1707, %v2197, 0
          %v2215 = vsel %vm1707, %v2198, 0
          %v2218 = vsel %vm1707, %v2199, 0
          %v2221 = vsel %vm1707, %v2200, 0
          %v2224 = vsel %vm1707, %v2201, 0
          %2226 = vmatprep.subr.bf16.mxu0 0
          %2227 = vmatpush1.bf16.msra.mxu0 %v2144
          %2228 = vmatprep.subr.bf16.mxu0 0
          %2229 = vmatpush1.bf16.msra.mxu0 %v2145
          %2230 = vmatprep.subr.bf16.mxu0 0
          %2231 = vmatpush1.bf16.msra.mxu0 0
          %2232 = vmatprep.subr.bf16.mxu0 0
          %2233 = vmatpush1.bf16.msra.mxu0 0
          %2234 = vmatprep.subr.bf16.mxu0 0
          %2235 = vmatpush1.bf16.msra.mxu0 0
          %2236 = vmatprep.subr.bf16.mxu0 0
          %2237 = vmatpush1.bf16.msra.mxu0 0
          %2238 = vmatprep.subr.bf16.mxu0 0
          %2239 = vmatpush1.bf16.msra.mxu0 0
          %2240 = vmatprep.subr.bf16.mxu0 0
          %2241 = vmatpush1.bf16.msra.mxu0 0
          %2242 = vmatprep.subr.bf16.mxu0 0
          %2243 = vmatpush1.bf16.msra.mxu0 0
          %2244 = vmatprep.subr.bf16.mxu0 0
          %2245 = vmatpush1.bf16.msra.mxu0 0
          %2246 = vmatprep.subr.bf16.mxu0 0
          %2247 = vmatpush1.bf16.msra.mxu0 0
          %2248 = vmatprep.subr.bf16.mxu0 0
          %2249 = vmatpush1.bf16.msra.mxu0 0
          %2250 = vmatprep.subr.bf16.mxu0 0
          %2251 = vmatpush1.bf16.msra.mxu0 0
          %2252 = vmatprep.subr.bf16.mxu0 0
          %2253 = vmatpush1.bf16.msra.mxu0 0
          %2254 = vmatprep.subr.bf16.mxu0 0
          %2255 = vmatpush1.bf16.msra.mxu0 0
          %2256 = vmatprep.subr.bf16.mxu0 0
          %2257 = vmatpush1.bf16.msra.mxu0 0
          %2258 = vmatprep.mubr.bf16.mxu0 0
          %2259 = vmatmul.mubr.bf16.gmra.mrb[0].mxu0 %v2203
          %v2260 = vpop.f32.mrb[0].mxu0
          %v2261 = vadd.f32 0.0, %v2260
          %v2262 = vpop.f32.mrb[0].mxu0
          %v2263 = vpop.f32.mrb[0].mxu0
          %v2264 = vadd.f32 0.0, %v2263
          %v2265 = vpop.f32.mrb[0].mxu0
          %2266 = vmatprep.mubr.bf16.mxu0 0
          %2267 = vmatmul.mubr.bf16.gmra.mrb[0].mxu0 %v2206
          %v2268 = vpop.f32.mrb[0].mxu0
          %v2269 = vadd.f32 0.0, %v2268
          %v2270 = vpop.f32.mrb[0].mxu0
          %v2271 = vpop.f32.mrb[0].mxu0
          %v2272 = vadd.f32 0.0, %v2271
          %v2273 = vpop.f32.mrb[0].mxu0
          %2274 = vmatprep.mubr.bf16.mxu0 0
          %2275 = vmatmul.mubr.bf16.gmra.mrb[0].mxu0 %v2209
          %v2276 = vpop.f32.mrb[0].mxu0
          %v2277 = vadd.f32 0.0, %v2276
          %v2278 = vpop.f32.mrb[0].mxu0
          %v2279 = vpop.f32.mrb[0].mxu0
          %v2280 = vadd.f32 0.0, %v2279
          %v2281 = vpop.f32.mrb[0].mxu0
          %2282 = vmatprep.mubr.bf16.mxu0 0
          %2283 = vmatmul.mubr.bf16.gmra.mrb[0].mxu0 %v2212
          %v2284 = vpop.f32.mrb[0].mxu0
          %v2285 = vadd.f32 0.0, %v2284
          %v2286 = vpop.f32.mrb[0].mxu0
          %v2287 = vpop.f32.mrb[0].mxu0
          %v2288 = vadd.f32 0.0, %v2287
          %v2289 = vpop.f32.mrb[0].mxu0
          %2290 = vmatprep.mubr.bf16.mxu0 0
          %2291 = vmatmul.mubr.bf16.gmra.mrb[0].mxu0 %v2215
          %v2292 = vpop.f32.mrb[0].mxu0
          %v2293 = vadd.f32 0.0, %v2292
          %v2294 = vpop.f32.mrb[0].mxu0
          %v2295 = vpop.f32.mrb[0].mxu0
          %v2296 = vadd.f32 0.0, %v2295
          %v2297 = vpop.f32.mrb[0].mxu0
          %2298 = vmatprep.mubr.bf16.mxu0 0
          %2299 = vmatmul.mubr.bf16.gmra.mrb[0].mxu0 %v2218
          %v2300 = vpop.f32.mrb[0].mxu0
          %v2301 = vadd.f32 0.0, %v2300
          %v2302 = vpop.f32.mrb[0].mxu0
          %v2303 = vpop.f32.mrb[0].mxu0
          %v2304 = vadd.f32 0.0, %v2303
          %v2305 = vpop.f32.mrb[0].mxu0
          %2306 = vmatprep.mubr.bf16.mxu0 0
          %2307 = vmatmul.mubr.bf16.gmra.mrb[0].mxu0 %v2221
          %v2308 = vpop.f32.mrb[0].mxu0
          %v2309 = vadd.f32 0.0, %v2308
          %v2310 = vpop.f32.mrb[0].mxu0
          %v2311 = vpop.f32.mrb[0].mxu0
          %v2312 = vadd.f32 0.0, %v2311
          %v2313 = vpop.f32.mrb[0].mxu0
          %2314 = vmatprep.mubr.bf16.mxu0 0
          %2315 = vmatmul.mubr.bf16.gmra.mrb[0].mxu0 %v2224
          %v2316 = vpop.f32.mrb[0].mxu0
          %v2317 = vadd.f32 0.0, %v2316
          %v2318 = vpop.f32.mrb[0].mxu0
          %v2319 = vpop.f32.mrb[0].mxu0
          %v2320 = vadd.f32 0.0, %v2319
          %v2321 = vpop.f32.mrb[0].mxu0
          %2322 = vdwg.mxu0
          %2323 = vst.msk [vmem:[#allocation8] sm:$0xff] %vm1075, %v2261
          %2324 = vst.msk [vmem:[#allocation8 + $0x8] sm:$0xff] %vm1075, %v2264
          %2325 = vst.msk [vmem:[#allocation8 + $0x10] sm:$0xff] %vm1075, %v2269
          %2326 = vst.msk [vmem:[#allocation8 + $0x18] sm:$0xff] %vm1075, %v2272
          %2327 = vst.msk [vmem:[#allocation8 + $0x20] sm:$0xff] %vm1075, %v2277
          %2328 = vst.msk [vmem:[#allocation8 + $0x28] sm:$0xff] %vm1075, %v2280
          %2329 = vst.msk [vmem:[#allocation8 + $0x30] sm:$0xff] %vm1075, %v2285
          %2330 = vst.msk [vmem:[#allocation8 + $0x38] sm:$0xff] %vm1075, %v2288
          %2331 = vst.msk [vmem:[#allocation8 + $0x40] sm:$0xff] %vm1075, %v2293
          %2332 = vst.msk [vmem:[#allocation8 + $0x48] sm:$0xff] %vm1075, %v2296
          %2333 = vst.msk [vmem:[#allocation8 + $0x50] sm:$0xff] %vm1075, %v2301
          %2334 = vst.msk [vmem:[#allocation8 + $0x58] sm:$0xff] %vm1075, %v2304
          %2335 = vst.msk [vmem:[#allocation8 + $0x60] sm:$0xff] %vm1075, %v2309
          %2336 = vst.msk [vmem:[#allocation8 + $0x68] sm:$0xff] %vm1075, %v2312
          %2337 = vst.msk [vmem:[#allocation8 + $0x70] sm:$0xff] %vm1075, %v2317
          %2338 = vst.msk [vmem:[#allocation8 + $0x78] sm:$0xff] %vm1075, %v2320
        $region110: #{push_grasp_net_forward.1} parent=93 // pred_fallthru
          _
        // Predicated region
        $region111: #{push_grasp_net_forward.1} parent=93 // pred_check
          %p2339 = pneg %p246
        $region112: #{push_grasp_net_forward.1} parent=93 // pred_check_branch
          %2341 = sbr.rel (%p2339) target = $region114
        $region113: #{push_grasp_net_forward.1} parent=93 // pred_region
          %s2343 = ssub.s32 2048, 2048
          %2344 = vsyncadd [#allocation7], %s2343
          %s2345 = sshll.u32 [#allocation6], 4
          %s2346 = int_to_ptr.vmem [resolvable:$true] %s2345
          %2351 = dma.vmem_to_hbm [thread:$0]  %s2346, 2048, %s9, [#allocation7], 128, 128, 8
        $region114: #{push_grasp_net_forward.1} parent=93 // pred_fallthru
          _
        // Predicated region
        $region115: #{push_grasp_net_forward.1} parent=93 // pred_check
          %p2352 = pneg %p267
        $region116: #{push_grasp_net_forward.1} parent=93 // pred_check_branch
          %2354 = sbr.rel (%p2352) target = $region118
        $region117: #{push_grasp_net_forward.1} parent=93 // pred_region
          %s2356 = ssub.s32 2048, 2048
          %2357 = vsyncadd [#allocation9], %s2356
          %s2358 = sshll.u32 [#allocation8], 4
          %s2359 = int_to_ptr.vmem [resolvable:$true] %s2358
          %2364 = dma.vmem_to_hbm [thread:$0]  %s2359, 2048, %s10, [#allocation9], 128, 128, 8
        $region118: #{push_grasp_net_forward.1} parent=93 // pred_fallthru
          _
        // Predicated region
        $region119: #{push_grasp_net_forward.1} parent=93 // pred_check
          %p2365 = pneg %p246
        $region120: #{push_grasp_net_forward.1} parent=93 // pred_check_branch
          %2367 = sbr.rel (%p2365) target = $region122
        $region121: #{push_grasp_net_forward.1} parent=93 // pred_region
          %2368 = dma.done [#allocation7], 2048
        $region122: #{push_grasp_net_forward.1} parent=93 // pred_fallthru
          _
        // Predicated region
        $region123: #{push_grasp_net_forward.1} parent=93 // pred_check
          %p2369 = pneg %p267
        $region124: #{push_grasp_net_forward.1} parent=93 // pred_check_branch
          %2371 = sbr.rel (%p2369) target = $region126
        $region125: #{push_grasp_net_forward.1} parent=93 // pred_region
          %2372 = dma.done [#allocation9], 2048
        $region126: #{push_grasp_net_forward.1} parent=93 // pred_fallthru
          _
      $region94: #{push_grasp_net_forward.1} parent=5 // pred_fallthru
        _
      %p2373 = scmp.le.s32.totalorder 2, %s19
      // Predicated region
      $region127: #{push_grasp_net_forward.1} parent=5 // pred_check
        %p2374 = pneg %p2373
      $region128: #{push_grasp_net_forward.1} parent=5 // pred_check_branch
        %2376 = sbr.rel (%p2374) target = $region130
      $region129: #{push_grasp_net_forward.1} parent=5 // pred_region
        %s2377 = ssub.s32 %s19, 2
      $region130: #{push_grasp_net_forward.1} parent=5 // pred_fallthru
        _
    $region6: #{push_grasp_net_forward.1} parent=1 // loop_footer
      %s23 = sadd.s32 1, %s19
    $region7: #{push_grasp_net_forward.1} parent=1 // loop_footer_branch
      %18 = sbr.rel target = $region3
    $region8: #{push_grasp_net_forward.1} parent=1 // loop_exit
      _
    %2378 = vsyncpa [#allocation7], 1
    %s2379 = scalar_lea.sflag [#allocation7], 1
    %2380 = vsyncpa %s2379, 1
    %2381 = vsyncpa [#allocation9], 1

</llo_original>
